<compile_context>
chip_gen: v7x
topology: tpu7x:2x2x1
jax: 0.10.0
libtpu: 0.0.40
codegen_flags: <defaults>
</compile_context>

<pallas_src>
import math
from functools import partial

import jax
import jax.numpy as jnp
from jax.experimental import pallas as pl
from jax.experimental.pallas import tpu as pltpu


# ----------------------------- fused Pallas kernel -------------------------- #

def _gcn_fused_kernel(x_ref, adj_ref,
                      w1p_ref, b1p_ref,
                      w3_ref, b3_ref,
                      w2p_ref, b2p_ref,
                      cmask_ref, o_ref, *, n_mid_layers):
    x = x_ref[...]                                    # (N, Fin)  f32
    adj = adj_ref[...].astype(jnp.bfloat16)           # (N, N)    bf16 MXU operand

    # ---- gc1: Fin -> H (projection residual).
    # adj @ (x @ W1) reassociated as (adj @ x) @ W1 (Fin < H => fewer MXU FLOPs),
    # projection fused into the main matmul along K: [adj@x | x] @ [[W1],[PW1]].
    ax = jnp.dot(adj, x.astype(jnp.bfloat16),
                 preferred_element_type=jnp.float32)              # (N, Fin) f32
    cat1 = jnp.concatenate([ax, x], axis=1).astype(jnp.bfloat16)  # (N, 2*Fin)
    h = jnp.dot(cat1, w1p_ref[...], preferred_element_type=jnp.float32)
    h = jnp.maximum(h + b1p_ref[...], 0.0)            # b1p = b1 + pb1 (pre-summed)
    # outer F.relu is idempotent; eval-mode dropout is identity.

    # ---- 4x gc3: H -> H (identity residual).  Weights loaded once; bias
    # broadcast hoisted out of the short unrolled loop.
    w3 = w3_ref[...]                                   # (H, H) bf16
    b3 = jnp.broadcast_to(b3_ref[...], h.shape)        # (N, H) f32 (hoisted)

    def gc3_body(_, hc):
        s = jnp.dot(hc.astype(jnp.bfloat16), w3,
                    preferred_element_type=jnp.float32)            # (N, H)
        o = jnp.dot(adj, s.astype(jnp.bfloat16),
                    preferred_element_type=jnp.float32)            # (N, H)
        return jnp.maximum(o + b3 + hc, 0.0)

    h = jax.lax.fori_loop(0, n_mid_layers, gc3_body, h, unroll=True)

    # ---- gc2: H -> C_pad (projection residual), reassociated + K-fused:
    #      [adj@h | h] @ [[W2],[PW2]]   (K = 2*H exactly fills a 128-deep MXU)
    ah = jnp.dot(adj, h.astype(jnp.bfloat16),
                 preferred_element_type=jnp.float32)               # (N, H)
    cat2 = jnp.concatenate([ah, h], axis=1).astype(jnp.bfloat16)   # (N, 2*H)
    logits = jnp.dot(cat2, w2p_ref[...], preferred_element_type=jnp.float32)
    logits = jnp.maximum(logits + b2p_ref[...], 0.0)   # b2p = b2 + pb2 (pre-summed)

    # ---- padded class columns killed with a precomputed additive mask
    #      (0 for real classes, -1e30 for pads) AFTER the relu, then the
    #      log_softmax epilogue.  Output store is lane-dense (N, C_pad).
    logits = logits + cmask_ref[...]
    m = jnp.max(logits, axis=-1, keepdims=True)
    s = logits - m
    lse = jnp.log(jnp.sum(jnp.exp(s), axis=-1, keepdims=True))
    o_ref[...] = s - lse


# ------------------------------ wrappers ------------------------------------ #

def _full_spec(shape):
    # full-array block (problem fits VMEM; single grid point)
    return pl.BlockSpec(shape, lambda: tuple(0 for _ in shape))


@partial(jax.jit, static_argnames=("nclass", "n_mid_layers"))
def gcn_forward(kparams, x, adj, *, nclass, n_mid_layers=4):
    N, nfeat = x.shape
    nhid = kparams["w3"].shape[0]
    c_pad = kparams["w2p"].shape[1]

    args = (x, adj,
            kparams["w1p"], kparams["b1p"],
            kparams["w3"], kparams["b3"],
            kparams["w2p"], kparams["b2p"],
            kparams["cmask"])

    # advisory cost hint so XLA schedules sensibly around the fused custom call
    flops = (2 * N * N * nfeat + 2 * N * (2 * nfeat) * nhid                 # gc1
             + n_mid_layers * (2 * N * nhid * nhid + 2 * N * N * nhid)      # 4x gc3
             + 2 * N * N * nhid + 2 * N * (2 * nhid) * c_pad)               # gc2
    io_bytes = sum(int(a.size) * a.dtype.itemsize for a in args) + N * c_pad * 4
    cost = pl.CostEstimate(flops=flops,
                           transcendentals=N * (c_pad + 1),
                           bytes_accessed=io_bytes)

    # everything is VMEM-resident for the whole pass -> size the scoped VMEM
    # limit from the actual footprint (headroom for bf16 casts / temporaries),
    # capped below v7x's 64 MiB physical VMEM.
    vmem_limit = int(min(64 * 1024 * 1024, max(16 * 1024 * 1024, 8 * io_bytes)))

    out_pad = pl.pallas_call(
        partial(_gcn_fused_kernel, n_mid_layers=n_mid_layers),
        out_shape=jax.ShapeDtypeStruct((N, c_pad), jnp.float32),
        in_specs=[_full_spec(a.shape) for a in args],
        out_specs=_full_spec((N, c_pad)),
        compiler_params=pltpu.CompilerParams(vmem_limit_bytes=vmem_limit),
        cost_estimate=cost,
    )(*args)

    return out_pad[:, :nclass]


# --------------------------- parameter init / packing ----------------------- #

def _init_gc_params(key, in_features, out_features):
    """GraphConvolution.reset_parameters: U(-1/sqrt(out), 1/sqrt(out))."""
    stdv = 1.0 / math.sqrt(out_features)
    kw, kb = jax.random.split(key)
    w = jax.random.uniform(kw, (in_features, out_features), jnp.float32, -stdv, stdv)
    b = jax.random.uniform(kb, (1, out_features), jnp.float32, -stdv, stdv)
    return w, b


def _init_linear_params(key, in_features, out_features):
    """nn.Linear default init: U(-1/sqrt(in), 1/sqrt(in)); stored pre-transposed [in,out]."""
    bound = 1.0 / math.sqrt(in_features)
    kw, kb = jax.random.split(key)
    w = jax.random.uniform(kw, (in_features, out_features), jnp.float32, -bound, bound)
    b = jax.random.uniform(kb, (1, out_features), jnp.float32, -bound, bound)
    return w, b


def init_gcn_params(key, nfeat, nhid, nclass):
    """f32 reference parameters (unpacked, unpadded)."""
    k1, k2, k3, k4, k5 = jax.random.split(key, 5)
    p = {}
    p["gc1_w"], p["gc1_b"] = _init_gc_params(k1, nfeat, nhid)
    p["gc3_w"], p["gc3_b"] = _init_gc_params(k2, nhid, nhid)
    p["gc2_w"], p["gc2_b"] = _init_gc_params(k3, nhid, nclass)
    # fixed deterministic stand-ins for the per-forward random nn.Linear projections
    p["gc1_pw"], p["gc1_pb"] = _init_linear_params(k4, nfeat, nhid)
    p["gc2_pw"], p["gc2_pb"] = _init_linear_params(k5, nhid, nclass)
    return p


def pack_kernel_params(params, nclass):
    """Pack reference params into fused kernel arguments.

    - projection matmuls folded into the main ones along K (weights stacked,
      biases pre-summed)
    - gc2 output dim zero-padded to a multiple of 128 (lane-dense store)
    - matmul weights pre-cast to bf16 (MXU operands); biases / mask stay f32
    """
    c_pad = max(128, -(-nclass // 128) * 128)
    pad = c_pad - nclass

    def padc(a):
        return jnp.pad(a, ((0, 0), (0, pad)))

    kp = {}
    kp["w1p"] = jnp.concatenate([params["gc1_w"], params["gc1_pw"]],
                                axis=0).astype(jnp.bfloat16)       # (2*Fin, H)
    kp["b1p"] = params["gc1_b"] + params["gc1_pb"]                 # (1, H)
    kp["w3"] = params["gc3_w"].astype(jnp.bfloat16)                # (H, H)
    kp["b3"] = params["gc3_b"]                                     # (1, H)
    kp["w2p"] = padc(jnp.concatenate([params["gc2_w"], params["gc2_pw"]],
                                     axis=0)).astype(jnp.bfloat16)  # (2*H, C_pad)
    kp["b2p"] = padc(params["gc2_b"] + params["gc2_pb"])            # (1, C_pad)
    kp["cmask"] = jnp.where(jnp.arange(c_pad)[None, :] < nclass,
                            0.0, -1e30).astype(jnp.float32)         # (1, C_pad)
    return kp


# --------------------------- pure-JAX reference ------------------------------ #

def _ref_forward(params, x, adj, n_mid_layers=4):
    """f32 reference in the original (non-reassociated) matmul order."""
    def gc(h, w, b, proj_w=None, proj_b=None):
        out = adj @ (h @ w) + b
        res = h if proj_w is None else (h @ proj_w + proj_b)
        return jnp.maximum(out + res, 0.0)

    h = gc(x, params["gc1_w"], params["gc1_b"], params["gc1_pw"], params["gc1_pb"])
    for _ in range(n_mid_layers):
        h = gc(h, params["gc3_w"], params["gc3_b"])
    logits = gc(h, params["gc2_w"], params["gc2_b"], params["gc2_pw"], params["gc2_pb"])
    m = jnp.max(logits, axis=-1, keepdims=True)
    s = logits - m
    return s - jnp.log(jnp.sum(jnp.exp(s), axis=-1, keepdims=True))


# --------------------------------- main -------------------------------------- #

if __name__ == "__main__":
    N, nfeat, nhid, nclass = 128, 32, 64, 8

    key = jax.random.PRNGKey(0)
    kx, kadj, kp = jax.random.split(key, 3)

    x = jax.random.normal(kx, (N, nfeat), dtype=jnp.float32)

    # dense symmetric-normalized-ish adjacency (synthetic)
    a = jax.random.uniform(kadj, (N, N), dtype=jnp.float32)
    a = (a > 0.9).astype(jnp.float32)
    a = a + a.T + jnp.eye(N, dtype=jnp.float32)
    deg = jnp.sum(a, axis=1, keepdims=True)
    adj = a / jnp.maximum(deg, 1.0)

    params = init_gcn_params(kp, nfeat, nhid, nclass)
    kparams = pack_kernel_params(params, nclass)

    out = gcn_forward(kparams, x, adj, nclass=nclass)
    jax.block_until_ready(out)

    assert out.shape == (N, nclass)
    # rows of log_softmax must exponentiate-sum to ~1
    row_sums = jnp.sum(jnp.exp(out), axis=1)
    assert bool(jnp.all(jnp.abs(row_sums - 1.0) < 1e-4))
    # match the f32 pure-JAX reference; tolerance loosened for bf16 MXU inputs
    ref = _ref_forward(params, x, adj)
    err = float(jnp.max(jnp.abs(out - ref)))
    assert err < 5e-2, f"max abs err vs f32 reference: {err}"

    print("KERNEL_OK")
</pallas_src>

<mosaic_0001>
module attributes {stable_mosaic.version = 11 : i64} {
  func.func @_gcn_fused_kernel(%arg0: memref<128x32xf32, #tpu.memory_space<vmem>>, %arg1: memref<128x128xf32, #tpu.memory_space<vmem>>, %arg2: memref<64x64xbf16, #tpu.memory_space<vmem>>, %arg3: memref<1x64xf32, #tpu.memory_space<vmem>>, %arg4: memref<64x64xbf16, #tpu.memory_space<vmem>>, %arg5: memref<1x64xf32, #tpu.memory_space<vmem>>, %arg6: memref<128x128xbf16, #tpu.memory_space<vmem>>, %arg7: memref<1x128xf32, #tpu.memory_space<vmem>>, %arg8: memref<1x128xf32, #tpu.memory_space<vmem>>, %arg9: memref<128x128xf32, #tpu.memory_space<vmem>>) attributes {dimension_semantics = [], scalar_prefetch = 0 : i64, scratch_operands = 0 : i64, tpu.core_type = #tpu.core_type<tc>} {
    %c0 = arith.constant 0 : index
    %c0_0 = arith.constant 0 : index
    %0 = vector.load %arg0[%c0, %c0_0] : memref<128x32xf32, #tpu.memory_space<vmem>>, vector<128x32xf32>
    %c0_1 = arith.constant 0 : index
    %c0_2 = arith.constant 0 : index
    %1 = vector.load %arg1[%c0_1, %c0_2] : memref<128x128xf32, #tpu.memory_space<vmem>>, vector<128x128xf32>
    %2 = arith.truncf %1 : vector<128x128xf32> to vector<128x128xbf16>
    %3 = arith.truncf %0 : vector<128x32xf32> to vector<128x32xbf16>
    %cst = arith.constant dense<0.000000e+00> : vector<128x32xf32>
    %4 = tpu.matmul %2, %3, %cst {dimension_numbers = #tpu.dot_dimension_numbers<[1], [0], [0], [1], [0, 0, 1, 1], [], []>} : vector<128x128xbf16>, vector<128x32xbf16>, vector<128x32xf32> -> vector<128x32xf32>
    %5 = tpu.concatenate %4, %0 in 1 : vector<128x32xf32>, vector<128x32xf32> -> vector<128x64xf32>
    %6 = arith.truncf %5 : vector<128x64xf32> to vector<128x64xbf16>
    %c0_3 = arith.constant 0 : index
    %c0_4 = arith.constant 0 : index
    %7 = vector.load %arg2[%c0_3, %c0_4] : memref<64x64xbf16, #tpu.memory_space<vmem>>, vector<64x64xbf16>
    %cst_5 = arith.constant dense<0.000000e+00> : vector<128x64xf32>
    %8 = tpu.matmul %6, %7, %cst_5 {dimension_numbers = #tpu.dot_dimension_numbers<[1], [0], [0], [1], [0, 0, 1, 1], [], []>} : vector<128x64xbf16>, vector<64x64xbf16>, vector<128x64xf32> -> vector<128x64xf32>
    %c0_6 = arith.constant 0 : index
    %c0_7 = arith.constant 0 : index
    %9 = vector.load %arg3[%c0_6, %c0_7] : memref<1x64xf32, #tpu.memory_space<vmem>>, vector<1x64xf32>
    %10 = vector.broadcast %9 : vector<1x64xf32> to vector<128x64xf32>
    %11 = arith.addf %8, %10 : vector<128x64xf32>
    %cst_8 = arith.constant 0.000000e+00 : f32
    %12 = vector.broadcast %cst_8 : f32 to vector<128x64xf32>
    %13 = arith.maximumf %11, %12 : vector<128x64xf32>
    %c0_9 = arith.constant 0 : index
    %c0_10 = arith.constant 0 : index
    %14 = vector.load %arg4[%c0_9, %c0_10] : memref<64x64xbf16, #tpu.memory_space<vmem>>, vector<64x64xbf16>
    %c0_11 = arith.constant 0 : index
    %c0_12 = arith.constant 0 : index
    %15 = vector.load %arg5[%c0_11, %c0_12] : memref<1x64xf32, #tpu.memory_space<vmem>>, vector<1x64xf32>
    %16 = vector.shape_cast %15 : vector<1x64xf32> to vector<1x64xf32>
    %17 = vector.broadcast %16 : vector<1x64xf32> to vector<128x64xf32>
    %c0_i32 = arith.constant 0 : i32
    %18 = arith.truncf %13 : vector<128x64xf32> to vector<128x64xbf16>
    %cst_13 = arith.constant dense<0.000000e+00> : vector<128x64xf32>
    %19 = tpu.matmul %18, %14, %cst_13 {dimension_numbers = #tpu.dot_dimension_numbers<[1], [0], [0], [1], [0, 0, 1, 1], [], []>} : vector<128x64xbf16>, vector<64x64xbf16>, vector<128x64xf32> -> vector<128x64xf32>
    %20 = arith.truncf %19 : vector<128x64xf32> to vector<128x64xbf16>
    %cst_14 = arith.constant dense<0.000000e+00> : vector<128x64xf32>
    %21 = tpu.matmul %2, %20, %cst_14 {dimension_numbers = #tpu.dot_dimension_numbers<[1], [0], [0], [1], [0, 0, 1, 1], [], []>} : vector<128x128xbf16>, vector<128x64xbf16>, vector<128x64xf32> -> vector<128x64xf32>
    %22 = arith.addf %21, %17 : vector<128x64xf32>
    %23 = arith.addf %22, %13 : vector<128x64xf32>
    %cst_15 = arith.constant 0.000000e+00 : f32
    %24 = vector.broadcast %cst_15 : f32 to vector<128x64xf32>
    %25 = arith.maximumf %23, %24 : vector<128x64xf32>
    %c1_i32 = arith.constant 1 : i32
    %26 = arith.truncf %25 : vector<128x64xf32> to vector<128x64xbf16>
    %cst_16 = arith.constant dense<0.000000e+00> : vector<128x64xf32>
    %27 = tpu.matmul %26, %14, %cst_16 {dimension_numbers = #tpu.dot_dimension_numbers<[1], [0], [0], [1], [0, 0, 1, 1], [], []>} : vector<128x64xbf16>, vector<64x64xbf16>, vector<128x64xf32> -> vector<128x64xf32>
    %28 = arith.truncf %27 : vector<128x64xf32> to vector<128x64xbf16>
    %cst_17 = arith.constant dense<0.000000e+00> : vector<128x64xf32>
    %29 = tpu.matmul %2, %28, %cst_17 {dimension_numbers = #tpu.dot_dimension_numbers<[1], [0], [0], [1], [0, 0, 1, 1], [], []>} : vector<128x128xbf16>, vector<128x64xbf16>, vector<128x64xf32> -> vector<128x64xf32>
    %30 = arith.addf %29, %17 : vector<128x64xf32>
    %31 = arith.addf %30, %25 : vector<128x64xf32>
    %cst_18 = arith.constant 0.000000e+00 : f32
    %32 = vector.broadcast %cst_18 : f32 to vector<128x64xf32>
    %33 = arith.maximumf %31, %32 : vector<128x64xf32>
    %c2_i32 = arith.constant 2 : i32
    %34 = arith.truncf %33 : vector<128x64xf32> to vector<128x64xbf16>
    %cst_19 = arith.constant dense<0.000000e+00> : vector<128x64xf32>
    %35 = tpu.matmul %34, %14, %cst_19 {dimension_numbers = #tpu.dot_dimension_numbers<[1], [0], [0], [1], [0, 0, 1, 1], [], []>} : vector<128x64xbf16>, vector<64x64xbf16>, vector<128x64xf32> -> vector<128x64xf32>
    %36 = arith.truncf %35 : vector<128x64xf32> to vector<128x64xbf16>
    %cst_20 = arith.constant dense<0.000000e+00> : vector<128x64xf32>
    %37 = tpu.matmul %2, %36, %cst_20 {dimension_numbers = #tpu.dot_dimension_numbers<[1], [0], [0], [1], [0, 0, 1, 1], [], []>} : vector<128x128xbf16>, vector<128x64xbf16>, vector<128x64xf32> -> vector<128x64xf32>
    %38 = arith.addf %37, %17 : vector<128x64xf32>
    %39 = arith.addf %38, %33 : vector<128x64xf32>
    %cst_21 = arith.constant 0.000000e+00 : f32
    %40 = vector.broadcast %cst_21 : f32 to vector<128x64xf32>
    %41 = arith.maximumf %39, %40 : vector<128x64xf32>
    %c3_i32 = arith.constant 3 : i32
    %42 = arith.truncf %41 : vector<128x64xf32> to vector<128x64xbf16>
    %cst_22 = arith.constant dense<0.000000e+00> : vector<128x64xf32>
    %43 = tpu.matmul %42, %14, %cst_22 {dimension_numbers = #tpu.dot_dimension_numbers<[1], [0], [0], [1], [0, 0, 1, 1], [], []>} : vector<128x64xbf16>, vector<64x64xbf16>, vector<128x64xf32> -> vector<128x64xf32>
    %44 = arith.truncf %43 : vector<128x64xf32> to vector<128x64xbf16>
    %cst_23 = arith.constant dense<0.000000e+00> : vector<128x64xf32>
    %45 = tpu.matmul %2, %44, %cst_23 {dimension_numbers = #tpu.dot_dimension_numbers<[1], [0], [0], [1], [0, 0, 1, 1], [], []>} : vector<128x128xbf16>, vector<128x64xbf16>, vector<128x64xf32> -> vector<128x64xf32>
    %46 = arith.addf %45, %17 : vector<128x64xf32>
    %47 = arith.addf %46, %41 : vector<128x64xf32>
    %cst_24 = arith.constant 0.000000e+00 : f32
    %48 = vector.broadcast %cst_24 : f32 to vector<128x64xf32>
    %49 = arith.maximumf %47, %48 : vector<128x64xf32>
    %50 = arith.truncf %49 : vector<128x64xf32> to vector<128x64xbf16>
    %cst_25 = arith.constant dense<0.000000e+00> : vector<128x64xf32>
    %51 = tpu.matmul %2, %50, %cst_25 {dimension_numbers = #tpu.dot_dimension_numbers<[1], [0], [0], [1], [0, 0, 1, 1], [], []>} : vector<128x128xbf16>, vector<128x64xbf16>, vector<128x64xf32> -> vector<128x64xf32>
    %52 = tpu.concatenate %51, %49 in 1 : vector<128x64xf32>, vector<128x64xf32> -> vector<128x128xf32>
    %53 = arith.truncf %52 : vector<128x128xf32> to vector<128x128xbf16>
    %c0_26 = arith.constant 0 : index
    %c0_27 = arith.constant 0 : index
    %54 = vector.load %arg6[%c0_26, %c0_27] : memref<128x128xbf16, #tpu.memory_space<vmem>>, vector<128x128xbf16>
    %cst_28 = arith.constant dense<0.000000e+00> : vector<128x128xf32>
    %55 = tpu.matmul %53, %54, %cst_28 {dimension_numbers = #tpu.dot_dimension_numbers<[1], [0], [0], [1], [0, 0, 1, 1], [], []>} : vector<128x128xbf16>, vector<128x128xbf16>, vector<128x128xf32> -> vector<128x128xf32>
    %c0_29 = arith.constant 0 : index
    %c0_30 = arith.constant 0 : index
    %56 = vector.load %arg7[%c0_29, %c0_30] : memref<1x128xf32, #tpu.memory_space<vmem>>, vector<1x128xf32>
    %57 = vector.broadcast %56 : vector<1x128xf32> to vector<128x128xf32>
    %58 = arith.addf %55, %57 : vector<128x128xf32>
    %cst_31 = arith.constant 0.000000e+00 : f32
    %59 = vector.broadcast %cst_31 : f32 to vector<128x128xf32>
    %60 = arith.maximumf %58, %59 : vector<128x128xf32>
    %c0_32 = arith.constant 0 : index
    %c0_33 = arith.constant 0 : index
    %61 = vector.load %arg8[%c0_32, %c0_33] : memref<1x128xf32, #tpu.memory_space<vmem>>, vector<1x128xf32>
    %62 = vector.broadcast %61 : vector<1x128xf32> to vector<128x128xf32>
    %63 = arith.addf %60, %62 : vector<128x128xf32>
    %cst_34 = arith.constant dense<0xFF800000> : vector<128xf32>
    %64 = vector.multi_reduction <maximumf>, %63, %cst_34 [1] : vector<128x128xf32> to vector<128xf32>
    %65 = vector.shape_cast %64 : vector<128xf32> to vector<128x1xf32>
    %66 = vector.broadcast %65 : vector<128x1xf32> to vector<128x128xf32>
    %67 = arith.subf %63, %66 : vector<128x128xf32>
    %68 = math.exp %67 : vector<128x128xf32>
    %cst_35 = arith.constant dense<0.000000e+00> : vector<128xf32>
    %69 = vector.multi_reduction <add>, %68, %cst_35 [1] : vector<128x128xf32> to vector<128xf32>
    %70 = vector.shape_cast %69 : vector<128xf32> to vector<128x1xf32>
    %71 = math.log %70 : vector<128x1xf32>
    %72 = vector.broadcast %71 : vector<128x1xf32> to vector<128x128xf32>
    %73 = arith.subf %67, %72 : vector<128x128xf32>
    %c0_36 = arith.constant 0 : index
    %c0_37 = arith.constant 0 : index
    %74 = vector.load %arg9[%c0_36, %c0_37] : memref<128x128xf32, #tpu.memory_space<vmem>>, vector<128x128xf32>
    tpu.vector_store %arg9[%c0_36, %c0_37], %73 {strides = array<i32>} : memref<128x128xf32, #tpu.memory_space<vmem>>, vector<128x128xf32>,
    return
  }
}

</mosaic_0001>

<llo_original>
// kernel: gcn_forward.1
$region0: #{gcn_forward.1}
  #allocation0 [shape = 'u32[]', space=smem, size = 0x4, offset = 0x4, fixed_abs, tag = 'smem constant byte address 0x4 - core index']
  #allocation1 [shape = 'u32[144,128]{1,0:T(1,128)}', space=vmem, size = 0x12000, scoped, tag = 'internal scratch']
  %s0 = inlined_call_operand.vmem [shape: f32[128,32], index: 0, kind: input, shape index: {}]
  %s1 = inlined_call_operand.vmem [shape: f32[128,128], index: 1, kind: input, shape index: {}]
  %s2 = inlined_call_operand.vmem [shape: bf16[64,64], index: 2, kind: input, shape index: {}]
  %s3 = inlined_call_operand.vmem [shape: f32[1,64], index: 3, kind: input, shape index: {}]
  %s4 = inlined_call_operand.hbm [shape: bf16[64,64], index: 4, kind: input, shape index: {}]
  %s5 = inlined_call_operand.vmem [shape: f32[1,64], index: 5, kind: input, shape index: {}]
  %s6 = inlined_call_operand.hbm [shape: bf16[128,128], index: 6, kind: input, shape index: {}]
  %s7 = inlined_call_operand.vmem [shape: f32[1,128], index: 7, kind: input, shape index: {}]
  %s8 = inlined_call_operand.vmem [shape: f32[1,128], index: 8, kind: input, shape index: {}]
  %s9 = inlined_call_operand.vmem [shape: f32[128,128], index: 9, kind: output, shape index: {}]
  %s10 = sld [smem:[#allocation0]]
  $region54: #{gcn_forward.1} parent=0
    _
  %s12 = ssub.s32 1, %s10
  %s13 = scalar_select 0, %s12, %s10
  $region1: #{gcn_forward.1} parent=0
    #allocation2 [shape = 'u8[16384]{0}', space=vmem, size = 0x4000, scoped, tag = 'input window, operand 4, single buffered']
    #allocation3 [shape = 's32[1]{0}', space=sflag, size = 0x4, scoped, tag = 'scoped memory for gcn_forward.1']
    #allocation4 [shape = 'u8[32768]{0}', space=vmem, size = 0x8000, scoped, tag = 'input window, operand 6, single buffered']
    #allocation5 [shape = 's32[1]{0}', space=sflag, size = 0x4, scoped, tag = 'scoped memory for gcn_forward.1']
    %14 = vsyncpa [#allocation3], 0
    %15 = vsyncpa [#allocation5], 0
    // Predicated region
    $region2: #{gcn_forward.1} parent=1 // pred_check
      _
    $region3: #{gcn_forward.1} parent=1 // pred_check_branch
      %17 = sbr.rel (0) target = $region5
    $region4: #{gcn_forward.1} parent=1 // pred_region
      _
    $region5: #{gcn_forward.1} parent=1 // pred_fallthru
      _
    // Predicated region
    $region6: #{gcn_forward.1} parent=1 // pred_check
      _
    $region7: #{gcn_forward.1} parent=1 // pred_check_branch
      %19 = sbr.rel (0) target = $region9
    $region8: #{gcn_forward.1} parent=1 // pred_region
      _
    $region9: #{gcn_forward.1} parent=1 // pred_fallthru
      _
    // Predicated region
    $region10: #{gcn_forward.1} parent=1 // pred_check
      _
    $region11: #{gcn_forward.1} parent=1 // pred_check_branch
      %21 = sbr.rel (0) target = $region13
    $region12: #{gcn_forward.1} parent=1 // pred_region
      _
    $region13: #{gcn_forward.1} parent=1 // pred_fallthru
      _
    // Predicated region
    $region14: #{gcn_forward.1} parent=1 // pred_check
      _
    $region15: #{gcn_forward.1} parent=1 // pred_check_branch
      %23 = sbr.rel (0) target = $region17
    $region16: #{gcn_forward.1} parent=1 // pred_region
      _
    $region17: #{gcn_forward.1} parent=1 // pred_fallthru
      _
    // Predicated region
    $region18: #{gcn_forward.1} parent=1 // pred_check
      _
    $region19: #{gcn_forward.1} parent=1 // pred_check_branch
      %25 = sbr.rel (0) target = $region21
    $region20: #{gcn_forward.1} parent=1 // pred_region
      %s27 = ssub.s32 512, 512
      %28 = vsyncadd [#allocation3], %s27
      %s29 = sshll.u32 [#allocation2], 4
      %s30 = int_to_ptr.vmem [resolvable:$true] %s29
      %35 = dma.hbm_to_vmem [thread:$0]  %s4, 512, %s30, [#allocation3], 64, 64, 4
    $region21: #{gcn_forward.1} parent=1 // pred_fallthru
      _
    // Predicated region
    $region22: #{gcn_forward.1} parent=1 // pred_check
      _
    $region23: #{gcn_forward.1} parent=1 // pred_check_branch
      %37 = sbr.rel (0) target = $region25
    $region24: #{gcn_forward.1} parent=1 // pred_region
      _
    $region25: #{gcn_forward.1} parent=1 // pred_fallthru
      _
    // Predicated region
    $region26: #{gcn_forward.1} parent=1 // pred_check
      _
    $region27: #{gcn_forward.1} parent=1 // pred_check_branch
      %39 = sbr.rel (0) target = $region29
    $region28: #{gcn_forward.1} parent=1 // pred_region
      %s41 = ssub.s32 1024, 1024
      %42 = vsyncadd [#allocation5], %s41
      %s43 = sshll.u32 [#allocation4], 4
      %s44 = int_to_ptr.vmem [resolvable:$true] %s43
      %49 = dma.hbm_to_vmem [thread:$0]  %s6, 1024, %s44, [#allocation5], 64, 64, 4
    $region29: #{gcn_forward.1} parent=1 // pred_fallthru
      _
    // Predicated region
    $region30: #{gcn_forward.1} parent=1 // pred_check
      _
    $region31: #{gcn_forward.1} parent=1 // pred_check_branch
      %51 = sbr.rel (0) target = $region33
    $region32: #{gcn_forward.1} parent=1 // pred_region
      _
    $region33: #{gcn_forward.1} parent=1 // pred_fallthru
      _
    // Predicated region
    $region34: #{gcn_forward.1} parent=1 // pred_check
      _
    $region35: #{gcn_forward.1} parent=1 // pred_check_branch
      %53 = sbr.rel (0) target = $region37
    $region36: #{gcn_forward.1} parent=1 // pred_region
      _
    $region37: #{gcn_forward.1} parent=1 // pred_fallthru
      _
    // Predicated region
    $region38: #{gcn_forward.1} parent=1 // pred_check
      _
    $region39: #{gcn_forward.1} parent=1 // pred_check_branch
      %55 = sbr.rel (0) target = $region41
    $region40: #{gcn_forward.1} parent=1 // pred_region
      %56 = dma.done [#allocation3], 512
    $region41: #{gcn_forward.1} parent=1 // pred_fallthru
      _
    // Predicated region
    $region42: #{gcn_forward.1} parent=1 // pred_check
      _
    $region43: #{gcn_forward.1} parent=1 // pred_check_branch
      %58 = sbr.rel (0) target = $region45
    $region44: #{gcn_forward.1} parent=1 // pred_region
      %59 = dma.done [#allocation5], 1024
    $region45: #{gcn_forward.1} parent=1 // pred_fallthru
      _
    %v61 = vld [vmem:[%s0] sm:$0xff]
    %v62 = vld [vmem:[%s0 + $0x8] sm:$0xff]
    %v63 = vld [vmem:[%s0 + $0x10] sm:$0xff]
    %v64 = vld [vmem:[%s0 + $0x18] sm:$0xff]
    %v65 = vld [vmem:[%s0 + $0x20] sm:$0xff]
    %v66 = vld [vmem:[%s0 + $0x28] sm:$0xff]
    %v67 = vld [vmem:[%s0 + $0x30] sm:$0xff]
    %v68 = vld [vmem:[%s0 + $0x38] sm:$0xff]
    %v69 = vld [vmem:[%s0 + $0x40] sm:$0xff]
    %v70 = vld [vmem:[%s0 + $0x48] sm:$0xff]
    %v71 = vld [vmem:[%s0 + $0x50] sm:$0xff]
    %v72 = vld [vmem:[%s0 + $0x58] sm:$0xff]
    %v73 = vld [vmem:[%s0 + $0x60] sm:$0xff]
    %v74 = vld [vmem:[%s0 + $0x68] sm:$0xff]
    %v75 = vld [vmem:[%s0 + $0x70] sm:$0xff]
    %v76 = vld [vmem:[%s0 + $0x78] sm:$0xff]
    %v77 = vld [vmem:[%s1] sm:$0xff]
    %v78 = vld [vmem:[%s1 + $0x8] sm:$0xff]
    %v79 = vld [vmem:[%s1 + $0x10] sm:$0xff]
    %v80 = vld [vmem:[%s1 + $0x18] sm:$0xff]
    %v81 = vld [vmem:[%s1 + $0x20] sm:$0xff]
    %v82 = vld [vmem:[%s1 + $0x28] sm:$0xff]
    %v83 = vld [vmem:[%s1 + $0x30] sm:$0xff]
    %v84 = vld [vmem:[%s1 + $0x38] sm:$0xff]
    %v85 = vld [vmem:[%s1 + $0x40] sm:$0xff]
    %v86 = vld [vmem:[%s1 + $0x48] sm:$0xff]
    %v87 = vld [vmem:[%s1 + $0x50] sm:$0xff]
    %v88 = vld [vmem:[%s1 + $0x58] sm:$0xff]
    %v89 = vld [vmem:[%s1 + $0x60] sm:$0xff]
    %v90 = vld [vmem:[%s1 + $0x68] sm:$0xff]
    %v91 = vld [vmem:[%s1 + $0x70] sm:$0xff]
    %v92 = vld [vmem:[%s1 + $0x78] sm:$0xff]
    %v93 = vpack.c.bf16 %v78, %v77
    %v94 = vpack.c.bf16 %v80, %v79
    %v95 = vpack.c.bf16 %v82, %v81
    %v96 = vpack.c.bf16 %v84, %v83
    %v97 = vpack.c.bf16 %v86, %v85
    %v98 = vpack.c.bf16 %v88, %v87
    %v99 = vpack.c.bf16 %v90, %v89
    %v100 = vpack.c.bf16 %v92, %v91
    %v101 = vpack.c.bf16 %v62, %v61
    %v102 = vpack.c.bf16 %v64, %v63
    %v103 = vpack.c.bf16 %v66, %v65
    %v104 = vpack.c.bf16 %v68, %v67
    %v105 = vpack.c.bf16 %v70, %v69
    %v106 = vpack.c.bf16 %v72, %v71
    %v107 = vpack.c.bf16 %v74, %v73
    %v108 = vpack.c.bf16 %v76, %v75
    %109 = vmatprep.subr.bf16.mxu0 0
    %110 = vmatpush1.bf16.msra.mxu0 %v101
    %111 = vmatprep.subr.bf16.mxu0 0
    %112 = vmatpush1.bf16.msra.mxu0 %v102
    %113 = vmatprep.subr.bf16.mxu0 0
    %114 = vmatpush1.bf16.msra.mxu0 %v103
    %115 = vmatprep.subr.bf16.mxu0 0
    %116 = vmatpush1.bf16.msra.mxu0 %v104
    %117 = vmatprep.subr.bf16.mxu0 0
    %118 = vmatpush1.bf16.msra.mxu0 %v105
    %119 = vmatprep.subr.bf16.mxu0 0
    %120 = vmatpush1.bf16.msra.mxu0 %v106
    %121 = vmatprep.subr.bf16.mxu0 0
    %122 = vmatpush1.bf16.msra.mxu0 %v107
    %123 = vmatprep.subr.bf16.mxu0 0
    %124 = vmatpush1.bf16.msra.mxu0 %v108
    %125 = vmatprep.subr.bf16.mxu0 0
    %126 = vmatpush1.bf16.msra.mxu0 0
    %127 = vmatprep.subr.bf16.mxu0 0
    %128 = vmatpush1.bf16.msra.mxu0 0
    %129 = vmatprep.subr.bf16.mxu0 0
    %130 = vmatpush1.bf16.msra.mxu0 0
    %131 = vmatprep.subr.bf16.mxu0 0
    %132 = vmatpush1.bf16.msra.mxu0 0
    %133 = vmatprep.subr.bf16.mxu0 0
    %134 = vmatpush1.bf16.msra.mxu0 0
    %135 = vmatprep.subr.bf16.mxu0 0
    %136 = vmatpush1.bf16.msra.mxu0 0
    %137 = vmatprep.subr.bf16.mxu0 0
    %138 = vmatpush1.bf16.msra.mxu0 0
    %139 = vmatprep.subr.bf16.mxu0 0
    %140 = vmatpush1.bf16.msra.mxu0 0
    %141 = vmatprep.mubr.bf16.mxu0 0
    %142 = vmatmul.mubr.bf16.gmra.mrb[0].mxu0 %v93
    %v143 = vpop.f32.mrb[0].mxu0
    %v144 = vadd.f32 0.0, %v143
    %v145 = vpop.f32.mrb[0].mxu0
    %v146 = vpop.f32.mrb[0].mxu0
    %v147 = vadd.f32 0.0, %v146
    %v148 = vpop.f32.mrb[0].mxu0
    %149 = vmatprep.mubr.bf16.mxu0 0
    %150 = vmatmul.mubr.bf16.gmra.mrb[0].mxu0 %v94
    %v151 = vpop.f32.mrb[0].mxu0
    %v152 = vadd.f32 0.0, %v151
    %v153 = vpop.f32.mrb[0].mxu0
    %v154 = vpop.f32.mrb[0].mxu0
    %v155 = vadd.f32 0.0, %v154
    %v156 = vpop.f32.mrb[0].mxu0
    %157 = vmatprep.mubr.bf16.mxu0 0
    %158 = vmatmul.mubr.bf16.gmra.mrb[0].mxu0 %v95
    %v159 = vpop.f32.mrb[0].mxu0
    %v160 = vadd.f32 0.0, %v159
    %v161 = vpop.f32.mrb[0].mxu0
    %v162 = vpop.f32.mrb[0].mxu0
    %v163 = vadd.f32 0.0, %v162
    %v164 = vpop.f32.mrb[0].mxu0
    %165 = vmatprep.mubr.bf16.mxu0 0
    %166 = vmatmul.mubr.bf16.gmra.mrb[0].mxu0 %v96
    %v167 = vpop.f32.mrb[0].mxu0
    %v168 = vadd.f32 0.0, %v167
    %v169 = vpop.f32.mrb[0].mxu0
    %v170 = vpop.f32.mrb[0].mxu0
    %v171 = vadd.f32 0.0, %v170
    %v172 = vpop.f32.mrb[0].mxu0
    %173 = vmatprep.mubr.bf16.mxu0 0
    %174 = vmatmul.mubr.bf16.gmra.mrb[0].mxu0 %v97
    %v175 = vpop.f32.mrb[0].mxu0
    %v176 = vadd.f32 0.0, %v175
    %v177 = vpop.f32.mrb[0].mxu0
    %v178 = vpop.f32.mrb[0].mxu0
    %v179 = vadd.f32 0.0, %v178
    %v180 = vpop.f32.mrb[0].mxu0
    %181 = vmatprep.mubr.bf16.mxu0 0
    %182 = vmatmul.mubr.bf16.gmra.mrb[0].mxu0 %v98
    %v183 = vpop.f32.mrb[0].mxu0
    %v184 = vadd.f32 0.0, %v183
    %v185 = vpop.f32.mrb[0].mxu0
    %v186 = vpop.f32.mrb[0].mxu0
    %v187 = vadd.f32 0.0, %v186
    %v188 = vpop.f32.mrb[0].mxu0
    %189 = vmatprep.mubr.bf16.mxu0 0
    %190 = vmatmul.mubr.bf16.gmra.mrb[0].mxu0 %v99
    %v191 = vpop.f32.mrb[0].mxu0
    %v192 = vadd.f32 0.0, %v191
    %v193 = vpop.f32.mrb[0].mxu0
    %v194 = vpop.f32.mrb[0].mxu0
    %v195 = vadd.f32 0.0, %v194
    %v196 = vpop.f32.mrb[0].mxu0
    %197 = vmatprep.mubr.bf16.mxu0 0
    %198 = vmatmul.mubr.bf16.gmra.mrb[0].mxu0 %v100
    %v199 = vpop.f32.mrb[0].mxu0
    %v200 = vadd.f32 0.0, %v199
    %v201 = vpop.f32.mrb[0].mxu0
    %v202 = vpop.f32.mrb[0].mxu0
    %v203 = vadd.f32 0.0, %v202
    %v204 = vpop.f32.mrb[0].mxu0
    %205 = vdwg.mxu0
    %222 = vrot.lane.b32.xlu0 %v61, 32
    %v223 = vpop.permute.xlu0 %222
    %224 = vrot.lane.b32.xlu0 %v62, 32
    %v225 = vpop.permute.xlu0 %224
    %226 = vrot.lane.b32.xlu0 %v63, 32
    %v227 = vpop.permute.xlu0 %226
    %228 = vrot.lane.b32.xlu0 %v64, 32
    %v229 = vpop.permute.xlu0 %228
    %230 = vrot.lane.b32.xlu0 %v65, 32
    %v231 = vpop.permute.xlu0 %230
    %232 = vrot.lane.b32.xlu0 %v66, 32
    %v233 = vpop.permute.xlu0 %232
    %234 = vrot.lane.b32.xlu0 %v67, 32
    %v235 = vpop.permute.xlu0 %234
    %236 = vrot.lane.b32.xlu0 %v68, 32
    %v237 = vpop.permute.xlu0 %236
    %238 = vrot.lane.b32.xlu0 %v69, 32
    %v239 = vpop.permute.xlu0 %238
    %240 = vrot.lane.b32.xlu0 %v70, 32
    %v241 = vpop.permute.xlu0 %240
    %242 = vrot.lane.b32.xlu0 %v71, 32
    %v243 = vpop.permute.xlu0 %242
    %244 = vrot.lane.b32.xlu0 %v72, 32
    %v245 = vpop.permute.xlu0 %244
    %246 = vrot.lane.b32.xlu0 %v73, 32
    %v247 = vpop.permute.xlu0 %246
    %248 = vrot.lane.b32.xlu0 %v74, 32
    %v249 = vpop.permute.xlu0 %248
    %250 = vrot.lane.b32.xlu0 %v75, 32
    %v251 = vpop.permute.xlu0 %250
    %252 = vrot.lane.b32.xlu0 %v76, 32
    %v253 = vpop.permute.xlu0 %252
    %vm270 = vcmask 261120
    %v271 = vsel %vm270, %v144, %v223
    %v272 = vsel %vm270, %v147, %v225
    %v273 = vsel %vm270, %v152, %v227
    %v274 = vsel %vm270, %v155, %v229
    %v275 = vsel %vm270, %v160, %v231
    %v276 = vsel %vm270, %v163, %v233
    %v277 = vsel %vm270, %v168, %v235
    %v278 = vsel %vm270, %v171, %v237
    %v279 = vsel %vm270, %v176, %v239
    %v280 = vsel %vm270, %v179, %v241
    %v281 = vsel %vm270, %v184, %v243
    %v282 = vsel %vm270, %v187, %v245
    %v283 = vsel %vm270, %v192, %v247
    %v284 = vsel %vm270, %v195, %v249
    %v285 = vsel %vm270, %v200, %v251
    %v286 = vsel %vm270, %v203, %v253
    %v287 = vpack.c.bf16 %v272, %v271
    %v288 = vpack.c.bf16 %v274, %v273
    %v289 = vpack.c.bf16 %v276, %v275
    %v290 = vpack.c.bf16 %v278, %v277
    %v291 = vpack.c.bf16 %v280, %v279
    %v292 = vpack.c.bf16 %v282, %v281
    %v293 = vpack.c.bf16 %v284, %v283
    %v294 = vpack.c.bf16 %v286, %v285
    %v295 = vld [vmem:[%s2] sm:$0xf]
    %v296 = vld [vmem:[%s2 + $0x4] sm:$0xf]
    %v297 = vld [vmem:[%s2 + $0x8] sm:$0xf]
    %v298 = vld [vmem:[%s2 + $0xc] sm:$0xf]
    %v299 = vld [vmem:[%s2 + $0x10] sm:$0xf]
    %v300 = vld [vmem:[%s2 + $0x14] sm:$0xf]
    %v301 = vld [vmem:[%s2 + $0x18] sm:$0xf]
    %v302 = vld [vmem:[%s2 + $0x1c] sm:$0xf]
    %v303 = vld [vmem:[%s3] sm:$0x1]
    %v305 = vlaneseq
    %v306 = vshrl.u32 %v305, 7
    %v307 = vsub.s32 0, %v306
    %v308 = vrot.slane %v303, %v307
    %v318 = vunpack.c.l.b16 %v295
    %v319 = vunpack.c.l.b16 %v296
    %v320 = vunpack.c.l.b16 %v297
    %v321 = vunpack.c.l.b16 %v298
    %v322 = vunpack.c.l.b16 %v299
    %v323 = vunpack.c.l.b16 %v300
    %v324 = vunpack.c.l.b16 %v301
    %v325 = vunpack.c.l.b16 %v302
    %v326 = vpack.c.b16 %v319, %v318
    %v327 = vpack.c.b16 %v321, %v320
    %v328 = vpack.c.b16 %v323, %v322
    %v329 = vpack.c.b16 %v325, %v324
    %vm334 = vcmask 523264
    %v336 = vsel %vm334, %v287, 0
    %v339 = vsel %vm334, %v288, 0
    %v342 = vsel %vm334, %v289, 0
    %v345 = vsel %vm334, %v290, 0
    %v348 = vsel %vm334, %v291, 0
    %v351 = vsel %vm334, %v292, 0
    %v354 = vsel %vm334, %v293, 0
    %v357 = vsel %vm334, %v294, 0
    %359 = vmatprep.subr.bf16.mxu0 0
    %360 = vmatpush1.bf16.msra.mxu0 %v326
    %361 = vmatprep.subr.bf16.mxu0 0
    %362 = vmatpush1.bf16.msra.mxu0 %v327
    %363 = vmatprep.subr.bf16.mxu0 0
    %364 = vmatpush1.bf16.msra.mxu0 %v328
    %365 = vmatprep.subr.bf16.mxu0 0
    %366 = vmatpush1.bf16.msra.mxu0 %v329
    %367 = vmatprep.subr.bf16.mxu0 0
    %368 = vmatpush1.bf16.msra.mxu0 0
    %369 = vmatprep.subr.bf16.mxu0 0
    %370 = vmatpush1.bf16.msra.mxu0 0
    %371 = vmatprep.subr.bf16.mxu0 0
    %372 = vmatpush1.bf16.msra.mxu0 0
    %373 = vmatprep.subr.bf16.mxu0 0
    %374 = vmatpush1.bf16.msra.mxu0 0
    %375 = vmatprep.subr.bf16.mxu0 0
    %376 = vmatpush1.bf16.msra.mxu0 0
    %377 = vmatprep.subr.bf16.mxu0 0
    %378 = vmatpush1.bf16.msra.mxu0 0
    %379 = vmatprep.subr.bf16.mxu0 0
    %380 = vmatpush1.bf16.msra.mxu0 0
    %381 = vmatprep.subr.bf16.mxu0 0
    %382 = vmatpush1.bf16.msra.mxu0 0
    %383 = vmatprep.subr.bf16.mxu0 0
    %384 = vmatpush1.bf16.msra.mxu0 0
    %385 = vmatprep.subr.bf16.mxu0 0
    %386 = vmatpush1.bf16.msra.mxu0 0
    %387 = vmatprep.subr.bf16.mxu0 0
    %388 = vmatpush1.bf16.msra.mxu0 0
    %389 = vmatprep.subr.bf16.mxu0 0
    %390 = vmatpush1.bf16.msra.mxu0 0
    %391 = vmatprep.mubr.bf16.mxu0 0
    %392 = vmatmul.mubr.bf16.gmra.mrb[0].mxu0 %v336
    %v393 = vpop.f32.mrb[0].mxu0
    %v394 = vadd.f32 %v308, %v393
    %v395 = vpop.f32.mrb[0].mxu0
    %v396 = vpop.f32.mrb[0].mxu0
    %v397 = vadd.f32 %v308, %v396
    %v398 = vpop.f32.mrb[0].mxu0
    %399 = vmatprep.mubr.bf16.mxu0 0
    %400 = vmatmul.mubr.bf16.gmra.mrb[0].mxu0 %v339
    %v401 = vpop.f32.mrb[0].mxu0
    %v402 = vadd.f32 %v308, %v401
    %v403 = vpop.f32.mrb[0].mxu0
    %v404 = vpop.f32.mrb[0].mxu0
    %v405 = vadd.f32 %v308, %v404
    %v406 = vpop.f32.mrb[0].mxu0
    %407 = vmatprep.mubr.bf16.mxu0 0
    %408 = vmatmul.mubr.bf16.gmra.mrb[0].mxu0 %v342
    %v409 = vpop.f32.mrb[0].mxu0
    %v410 = vadd.f32 %v308, %v409
    %v411 = vpop.f32.mrb[0].mxu0
    %v412 = vpop.f32.mrb[0].mxu0
    %v413 = vadd.f32 %v308, %v412
    %v414 = vpop.f32.mrb[0].mxu0
    %415 = vmatprep.mubr.bf16.mxu0 0
    %416 = vmatmul.mubr.bf16.gmra.mrb[0].mxu0 %v345
    %v417 = vpop.f32.mrb[0].mxu0
    %v418 = vadd.f32 %v308, %v417
    %v419 = vpop.f32.mrb[0].mxu0
    %v420 = vpop.f32.mrb[0].mxu0
    %v421 = vadd.f32 %v308, %v420
    %v422 = vpop.f32.mrb[0].mxu0
    %423 = vmatprep.mubr.bf16.mxu0 0
    %424 = vmatmul.mubr.bf16.gmra.mrb[0].mxu0 %v348
    %v425 = vpop.f32.mrb[0].mxu0
    %v426 = vadd.f32 %v308, %v425
    %v427 = vpop.f32.mrb[0].mxu0
    %v428 = vpop.f32.mrb[0].mxu0
    %v429 = vadd.f32 %v308, %v428
    %v430 = vpop.f32.mrb[0].mxu0
    %431 = vmatprep.mubr.bf16.mxu0 0
    %432 = vmatmul.mubr.bf16.gmra.mrb[0].mxu0 %v351
    %v433 = vpop.f32.mrb[0].mxu0
    %v434 = vadd.f32 %v308, %v433
    %v435 = vpop.f32.mrb[0].mxu0
    %v436 = vpop.f32.mrb[0].mxu0
    %v437 = vadd.f32 %v308, %v436
    %v438 = vpop.f32.mrb[0].mxu0
    %439 = vmatprep.mubr.bf16.mxu0 0
    %440 = vmatmul.mubr.bf16.gmra.mrb[0].mxu0 %v354
    %v441 = vpop.f32.mrb[0].mxu0
    %v442 = vadd.f32 %v308, %v441
    %v443 = vpop.f32.mrb[0].mxu0
    %v444 = vpop.f32.mrb[0].mxu0
    %v445 = vadd.f32 %v308, %v444
    %v446 = vpop.f32.mrb[0].mxu0
    %447 = vmatprep.mubr.bf16.mxu0 0
    %448 = vmatmul.mubr.bf16.gmra.mrb[0].mxu0 %v357
    %v449 = vpop.f32.mrb[0].mxu0
    %v450 = vadd.f32 %v308, %v449
    %v451 = vpop.f32.mrb[0].mxu0
    %v452 = vpop.f32.mrb[0].mxu0
    %v453 = vadd.f32 %v308, %v452
    %v454 = vpop.f32.mrb[0].mxu0
    %455 = vdwg.mxu0
    %v456 = vmax.f32 %v394, 0.0
    %v457 = vmax.f32 %v397, 0.0
    %v458 = vmax.f32 %v402, 0.0
    %v459 = vmax.f32 %v405, 0.0
    %v460 = vmax.f32 %v410, 0.0
    %v461 = vmax.f32 %v413, 0.0
    %v462 = vmax.f32 %v418, 0.0
    %v463 = vmax.f32 %v421, 0.0
    %v464 = vmax.f32 %v426, 0.0
    %v465 = vmax.f32 %v429, 0.0
    %v466 = vmax.f32 %v434, 0.0
    %v467 = vmax.f32 %v437, 0.0
    %v468 = vmax.f32 %v442, 0.0
    %v469 = vmax.f32 %v445, 0.0
    %v470 = vmax.f32 %v450, 0.0
    %v471 = vmax.f32 %v453, 0.0
    %v472 = vld [vmem:[#allocation2] sm:$0xf]
    %v473 = vld [vmem:[#allocation2 + $0x4] sm:$0xf]
    %v474 = vld [vmem:[#allocation2 + $0x8] sm:$0xf]
    %v475 = vld [vmem:[#allocation2 + $0xc] sm:$0xf]
    %v476 = vld [vmem:[#allocation2 + $0x10] sm:$0xf]
    %v477 = vld [vmem:[#allocation2 + $0x14] sm:$0xf]
    %v478 = vld [vmem:[#allocation2 + $0x18] sm:$0xf]
    %v479 = vld [vmem:[#allocation2 + $0x1c] sm:$0xf]
    %v480 = vld [vmem:[%s5] sm:$0x1]
    %v482 = vlaneseq
    %v483 = vshrl.u32 %v482, 7
    %v484 = vsub.s32 0, %v483
    %v485 = vrot.slane %v480, %v484
    %v487 = vpack.c.bf16 %v457, %v456
    %v488 = vpack.c.bf16 %v459, %v458
    %v489 = vpack.c.bf16 %v461, %v460
    %v490 = vpack.c.bf16 %v463, %v462
    %v491 = vpack.c.bf16 %v465, %v464
    %v492 = vpack.c.bf16 %v467, %v466
    %v493 = vpack.c.bf16 %v469, %v468
    %v494 = vpack.c.bf16 %v471, %v470
    %v503 = vunpack.c.l.b16 %v472
    %v504 = vunpack.c.l.b16 %v473
    %v505 = vunpack.c.l.b16 %v474
    %v506 = vunpack.c.l.b16 %v475
    %v507 = vunpack.c.l.b16 %v476
    %v508 = vunpack.c.l.b16 %v477
    %v509 = vunpack.c.l.b16 %v478
    %v510 = vunpack.c.l.b16 %v479
    %v511 = vpack.c.b16 %v504, %v503
    %v512 = vpack.c.b16 %v506, %v505
    %v513 = vpack.c.b16 %v508, %v507
    %v514 = vpack.c.b16 %v510, %v509
    %v520 = vsel %vm334, %v487, 0
    %v523 = vsel %vm334, %v488, 0
    %v526 = vsel %vm334, %v489, 0
    %v529 = vsel %vm334, %v490, 0
    %v532 = vsel %vm334, %v491, 0
    %v535 = vsel %vm334, %v492, 0
    %v538 = vsel %vm334, %v493, 0
    %v541 = vsel %vm334, %v494, 0
    %543 = vmatprep.subr.bf16.mxu0 0
    %544 = vmatpush1.bf16.msra.mxu0 %v511
    %545 = vmatprep.subr.bf16.mxu0 0
    %546 = vmatpush1.bf16.msra.mxu0 %v512
    %547 = vmatprep.subr.bf16.mxu0 0
    %548 = vmatpush1.bf16.msra.mxu0 %v513
    %549 = vmatprep.subr.bf16.mxu0 0
    %550 = vmatpush1.bf16.msra.mxu0 %v514
    %551 = vmatprep.subr.bf16.mxu0 0
    %552 = vmatpush1.bf16.msra.mxu0 0
    %553 = vmatprep.subr.bf16.mxu0 0
    %554 = vmatpush1.bf16.msra.mxu0 0
    %555 = vmatprep.subr.bf16.mxu0 0
    %556 = vmatpush1.bf16.msra.mxu0 0
    %557 = vmatprep.subr.bf16.mxu0 0
    %558 = vmatpush1.bf16.msra.mxu0 0
    %559 = vmatprep.subr.bf16.mxu0 0
    %560 = vmatpush1.bf16.msra.mxu0 0
    %561 = vmatprep.subr.bf16.mxu0 0
    %562 = vmatpush1.bf16.msra.mxu0 0
    %563 = vmatprep.subr.bf16.mxu0 0
    %564 = vmatpush1.bf16.msra.mxu0 0
    %565 = vmatprep.subr.bf16.mxu0 0
    %566 = vmatpush1.bf16.msra.mxu0 0
    %567 = vmatprep.subr.bf16.mxu0 0
    %568 = vmatpush1.bf16.msra.mxu0 0
    %569 = vmatprep.subr.bf16.mxu0 0
    %570 = vmatpush1.bf16.msra.mxu0 0
    %571 = vmatprep.subr.bf16.mxu0 0
    %572 = vmatpush1.bf16.msra.mxu0 0
    %573 = vmatprep.subr.bf16.mxu0 0
    %574 = vmatpush1.bf16.msra.mxu0 0
    %575 = vmatprep.mubr.bf16.mxu0 0
    %576 = vmatmul.mubr.bf16.gmra.mrb[0].mxu0 %v520
    %v577 = vpop.f32.mrb[0].mxu0
    %v578 = vadd.f32 0.0, %v577
    %v579 = vpop.f32.mrb[0].mxu0
    %v580 = vpop.f32.mrb[0].mxu0
    %v581 = vadd.f32 0.0, %v580
    %v582 = vpop.f32.mrb[0].mxu0
    %583 = vmatprep.mubr.bf16.mxu0 0
    %584 = vmatmul.mubr.bf16.gmra.mrb[0].mxu0 %v523
    %v585 = vpop.f32.mrb[0].mxu0
    %v586 = vadd.f32 0.0, %v585
    %v587 = vpop.f32.mrb[0].mxu0
    %v588 = vpop.f32.mrb[0].mxu0
    %v589 = vadd.f32 0.0, %v588
    %v590 = vpop.f32.mrb[0].mxu0
    %591 = vmatprep.mubr.bf16.mxu0 0
    %592 = vmatmul.mubr.bf16.gmra.mrb[0].mxu0 %v526
    %v593 = vpop.f32.mrb[0].mxu0
    %v594 = vadd.f32 0.0, %v593
    %v595 = vpop.f32.mrb[0].mxu0
    %v596 = vpop.f32.mrb[0].mxu0
    %v597 = vadd.f32 0.0, %v596
    %v598 = vpop.f32.mrb[0].mxu0
    %599 = vmatprep.mubr.bf16.mxu0 0
    %600 = vmatmul.mubr.bf16.gmra.mrb[0].mxu0 %v529
    %v601 = vpop.f32.mrb[0].mxu0
    %v602 = vadd.f32 0.0, %v601
    %v603 = vpop.f32.mrb[0].mxu0
    %v604 = vpop.f32.mrb[0].mxu0
    %v605 = vadd.f32 0.0, %v604
    %v606 = vpop.f32.mrb[0].mxu0
    %607 = vmatprep.mubr.bf16.mxu0 0
    %608 = vmatmul.mubr.bf16.gmra.mrb[0].mxu0 %v532
    %v609 = vpop.f32.mrb[0].mxu0
    %v610 = vadd.f32 0.0, %v609
    %v611 = vpop.f32.mrb[0].mxu0
    %v612 = vpop.f32.mrb[0].mxu0
    %v613 = vadd.f32 0.0, %v612
    %v614 = vpop.f32.mrb[0].mxu0
    %615 = vmatprep.mubr.bf16.mxu0 0
    %616 = vmatmul.mubr.bf16.gmra.mrb[0].mxu0 %v535
    %v617 = vpop.f32.mrb[0].mxu0
    %v618 = vadd.f32 0.0, %v617
    %v619 = vpop.f32.mrb[0].mxu0
    %v620 = vpop.f32.mrb[0].mxu0
    %v621 = vadd.f32 0.0, %v620
    %v622 = vpop.f32.mrb[0].mxu0
    %623 = vmatprep.mubr.bf16.mxu0 0
    %624 = vmatmul.mubr.bf16.gmra.mrb[0].mxu0 %v538
    %v625 = vpop.f32.mrb[0].mxu0
    %v626 = vadd.f32 0.0, %v625
    %v627 = vpop.f32.mrb[0].mxu0
    %v628 = vpop.f32.mrb[0].mxu0
    %v629 = vadd.f32 0.0, %v628
    %v630 = vpop.f32.mrb[0].mxu0
    %631 = vmatprep.mubr.bf16.mxu0 0
    %632 = vmatmul.mubr.bf16.gmra.mrb[0].mxu0 %v541
    %v633 = vpop.f32.mrb[0].mxu0
    %v634 = vadd.f32 0.0, %v633
    %v635 = vpop.f32.mrb[0].mxu0
    %v636 = vpop.f32.mrb[0].mxu0
    %v637 = vadd.f32 0.0, %v636
    %v638 = vpop.f32.mrb[0].mxu0
    %639 = vdwg.mxu0
    %v640 = vpack.c.bf16 %v581, %v578
    %v641 = vpack.c.bf16 %v589, %v586
    %v642 = vpack.c.bf16 %v597, %v594
    %v643 = vpack.c.bf16 %v605, %v602
    %v644 = vpack.c.bf16 %v613, %v610
    %v645 = vpack.c.bf16 %v621, %v618
    %v646 = vpack.c.bf16 %v629, %v626
    %v647 = vpack.c.bf16 %v637, %v634
    %648 = vmatprep.subr.bf16.mxu0 0
    %649 = vmatpush1.bf16.msra.mxu0 %v640
    %650 = vmatprep.subr.bf16.mxu0 0
    %651 = vmatpush1.bf16.msra.mxu0 %v641
    %652 = vmatprep.subr.bf16.mxu0 0
    %653 = vmatpush1.bf16.msra.mxu0 %v642
    %654 = vmatprep.subr.bf16.mxu0 0
    %655 = vmatpush1.bf16.msra.mxu0 %v643
    %656 = vmatprep.subr.bf16.mxu0 0
    %657 = vmatpush1.bf16.msra.mxu0 %v644
    %658 = vmatprep.subr.bf16.mxu0 0
    %659 = vmatpush1.bf16.msra.mxu0 %v645
    %660 = vmatprep.subr.bf16.mxu0 0
    %661 = vmatpush1.bf16.msra.mxu0 %v646
    %662 = vmatprep.subr.bf16.mxu0 0
    %663 = vmatpush1.bf16.msra.mxu0 %v647
    %664 = vmatprep.subr.bf16.mxu0 0
    %665 = vmatpush1.bf16.msra.mxu0 0
    %666 = vmatprep.subr.bf16.mxu0 0
    %667 = vmatpush1.bf16.msra.mxu0 0
    %668 = vmatprep.subr.bf16.mxu0 0
    %669 = vmatpush1.bf16.msra.mxu0 0
    %670 = vmatprep.subr.bf16.mxu0 0
    %671 = vmatpush1.bf16.msra.mxu0 0
    %672 = vmatprep.subr.bf16.mxu0 0
    %673 = vmatpush1.bf16.msra.mxu0 0
    %674 = vmatprep.subr.bf16.mxu0 0
    %675 = vmatpush1.bf16.msra.mxu0 0
    %676 = vmatprep.subr.bf16.mxu0 0
    %677 = vmatpush1.bf16.msra.mxu0 0
    %678 = vmatprep.subr.bf16.mxu0 0
    %679 = vmatpush1.bf16.msra.mxu0 0
    %680 = vmatprep.mubr.bf16.mxu0 0
    %681 = vmatmul.mubr.bf16.gmra.mrb[0].mxu0 %v93
    %v682 = vpop.f32.mrb[0].mxu0
    %v683 = vadd.f32 %v485, %v682
    %v684 = vpop.f32.mrb[0].mxu0
    %v685 = vpop.f32.mrb[0].mxu0
    %v686 = vadd.f32 %v485, %v685
    %v687 = vpop.f32.mrb[0].mxu0
    %688 = vmatprep.mubr.bf16.mxu0 0
    %689 = vmatmul.mubr.bf16.gmra.mrb[0].mxu0 %v94
    %v690 = vpop.f32.mrb[0].mxu0
    %v691 = vadd.f32 %v485, %v690
    %v692 = vpop.f32.mrb[0].mxu0
    %v693 = vpop.f32.mrb[0].mxu0
    %v694 = vadd.f32 %v485, %v693
    %v695 = vpop.f32.mrb[0].mxu0
    %696 = vmatprep.mubr.bf16.mxu0 0
    %697 = vmatmul.mubr.bf16.gmra.mrb[0].mxu0 %v95
    %v698 = vpop.f32.mrb[0].mxu0
    %v699 = vadd.f32 %v485, %v698
    %v700 = vpop.f32.mrb[0].mxu0
    %v701 = vpop.f32.mrb[0].mxu0
    %v702 = vadd.f32 %v485, %v701
    %v703 = vpop.f32.mrb[0].mxu0
    %704 = vmatprep.mubr.bf16.mxu0 0
    %705 = vmatmul.mubr.bf16.gmra.mrb[0].mxu0 %v96
    %v706 = vpop.f32.mrb[0].mxu0
    %v707 = vadd.f32 %v485, %v706
    %v708 = vpop.f32.mrb[0].mxu0
    %v709 = vpop.f32.mrb[0].mxu0
    %v710 = vadd.f32 %v485, %v709
    %v711 = vpop.f32.mrb[0].mxu0
    %712 = vmatprep.mubr.bf16.mxu0 0
    %713 = vmatmul.mubr.bf16.gmra.mrb[0].mxu0 %v97
    %v714 = vpop.f32.mrb[0].mxu0
    %v715 = vadd.f32 %v485, %v714
    %v716 = vpop.f32.mrb[0].mxu0
    %v717 = vpop.f32.mrb[0].mxu0
    %v718 = vadd.f32 %v485, %v717
    %v719 = vpop.f32.mrb[0].mxu0
    %720 = vmatprep.mubr.bf16.mxu0 0
    %721 = vmatmul.mubr.bf16.gmra.mrb[0].mxu0 %v98
    %v722 = vpop.f32.mrb[0].mxu0
    %v723 = vadd.f32 %v485, %v722
    %v724 = vpop.f32.mrb[0].mxu0
    %v725 = vpop.f32.mrb[0].mxu0
    %v726 = vadd.f32 %v485, %v725
    %v727 = vpop.f32.mrb[0].mxu0
    %728 = vmatprep.mubr.bf16.mxu0 0
    %729 = vmatmul.mubr.bf16.gmra.mrb[0].mxu0 %v99
    %v730 = vpop.f32.mrb[0].mxu0
    %v731 = vadd.f32 %v485, %v730
    %v732 = vpop.f32.mrb[0].mxu0
    %v733 = vpop.f32.mrb[0].mxu0
    %v734 = vadd.f32 %v485, %v733
    %v735 = vpop.f32.mrb[0].mxu0
    %736 = vmatprep.mubr.bf16.mxu0 0
    %737 = vmatmul.mubr.bf16.gmra.mrb[0].mxu0 %v100
    %v738 = vpop.f32.mrb[0].mxu0
    %v739 = vadd.f32 %v485, %v738
    %v740 = vpop.f32.mrb[0].mxu0
    %v741 = vpop.f32.mrb[0].mxu0
    %v742 = vadd.f32 %v485, %v741
    %v743 = vpop.f32.mrb[0].mxu0
    %744 = vdwg.mxu0
    %v745 = vadd.f32 %v683, %v456
    %v746 = vadd.f32 %v686, %v457
    %v747 = vadd.f32 %v691, %v458
    %v748 = vadd.f32 %v694, %v459
    %v749 = vadd.f32 %v699, %v460
    %v750 = vadd.f32 %v702, %v461
    %v751 = vadd.f32 %v707, %v462
    %v752 = vadd.f32 %v710, %v463
    %v753 = vadd.f32 %v715, %v464
    %v754 = vadd.f32 %v718, %v465
    %v755 = vadd.f32 %v723, %v466
    %v756 = vadd.f32 %v726, %v467
    %v757 = vadd.f32 %v731, %v468
    %v758 = vadd.f32 %v734, %v469
    %v759 = vadd.f32 %v739, %v470
    %v760 = vadd.f32 %v742, %v471
    %v761 = vmax.f32 %v745, 0.0
    %v762 = vmax.f32 %v746, 0.0
    %v763 = vmax.f32 %v747, 0.0
    %v764 = vmax.f32 %v748, 0.0
    %v765 = vmax.f32 %v749, 0.0
    %v766 = vmax.f32 %v750, 0.0
    %v767 = vmax.f32 %v751, 0.0
    %v768 = vmax.f32 %v752, 0.0
    %v769 = vmax.f32 %v753, 0.0
    %v770 = vmax.f32 %v754, 0.0
    %v771 = vmax.f32 %v755, 0.0
    %v772 = vmax.f32 %v756, 0.0
    %v773 = vmax.f32 %v757, 0.0
    %v774 = vmax.f32 %v758, 0.0
    %v775 = vmax.f32 %v759, 0.0
    %v776 = vmax.f32 %v760, 0.0
    %v777 = vpack.c.bf16 %v762, %v761
    %v778 = vpack.c.bf16 %v764, %v763
    %v779 = vpack.c.bf16 %v766, %v765
    %v780 = vpack.c.bf16 %v768, %v767
    %v781 = vpack.c.bf16 %v770, %v769
    %v782 = vpack.c.bf16 %v772, %v771
    %v783 = vpack.c.bf16 %v774, %v773
    %v784 = vpack.c.bf16 %v776, %v775
    %v786 = vsel %vm334, %v777, 0
    %v789 = vsel %vm334, %v778, 0
    %v792 = vsel %vm334, %v779, 0
    %v795 = vsel %vm334, %v780, 0
    %v798 = vsel %vm334, %v781, 0
    %v801 = vsel %vm334, %v782, 0
    %v804 = vsel %vm334, %v783, 0
    %v807 = vsel %vm334, %v784, 0
    %809 = vmatprep.subr.bf16.mxu0 0
    %810 = vmatpush1.bf16.msra.mxu0 %v511
    %811 = vmatprep.subr.bf16.mxu0 0
    %812 = vmatpush1.bf16.msra.mxu0 %v512
    %813 = vmatprep.subr.bf16.mxu0 0
    %814 = vmatpush1.bf16.msra.mxu0 %v513
    %815 = vmatprep.subr.bf16.mxu0 0
    %816 = vmatpush1.bf16.msra.mxu0 %v514
    %817 = vmatprep.subr.bf16.mxu0 0
    %818 = vmatpush1.bf16.msra.mxu0 0
    %819 = vmatprep.subr.bf16.mxu0 0
    %820 = vmatpush1.bf16.msra.mxu0 0
    %821 = vmatprep.subr.bf16.mxu0 0
    %822 = vmatpush1.bf16.msra.mxu0 0
    %823 = vmatprep.subr.bf16.mxu0 0
    %824 = vmatpush1.bf16.msra.mxu0 0
    %825 = vmatprep.subr.bf16.mxu0 0
    %826 = vmatpush1.bf16.msra.mxu0 0
    %827 = vmatprep.subr.bf16.mxu0 0
    %828 = vmatpush1.bf16.msra.mxu0 0
    %829 = vmatprep.subr.bf16.mxu0 0
    %830 = vmatpush1.bf16.msra.mxu0 0
    %831 = vmatprep.subr.bf16.mxu0 0
    %832 = vmatpush1.bf16.msra.mxu0 0
    %833 = vmatprep.subr.bf16.mxu0 0
    %834 = vmatpush1.bf16.msra.mxu0 0
    %835 = vmatprep.subr.bf16.mxu0 0
    %836 = vmatpush1.bf16.msra.mxu0 0
    %837 = vmatprep.subr.bf16.mxu0 0
    %838 = vmatpush1.bf16.msra.mxu0 0
    %839 = vmatprep.subr.bf16.mxu0 0
    %840 = vmatpush1.bf16.msra.mxu0 0
    %841 = vmatprep.mubr.bf16.mxu0 0
    %842 = vmatmul.mubr.bf16.gmra.mrb[0].mxu0 %v786
    %v843 = vpop.f32.mrb[0].mxu0
    %v844 = vadd.f32 0.0, %v843
    %v845 = vpop.f32.mrb[0].mxu0
    %v846 = vpop.f32.mrb[0].mxu0
    %v847 = vadd.f32 0.0, %v846
    %v848 = vpop.f32.mrb[0].mxu0
    %849 = vmatprep.mubr.bf16.mxu0 0
    %850 = vmatmul.mubr.bf16.gmra.mrb[0].mxu0 %v789
    %v851 = vpop.f32.mrb[0].mxu0
    %v852 = vadd.f32 0.0, %v851
    %v853 = vpop.f32.mrb[0].mxu0
    %v854 = vpop.f32.mrb[0].mxu0
    %v855 = vadd.f32 0.0, %v854
    %v856 = vpop.f32.mrb[0].mxu0
    %857 = vmatprep.mubr.bf16.mxu0 0
    %858 = vmatmul.mubr.bf16.gmra.mrb[0].mxu0 %v792
    %v859 = vpop.f32.mrb[0].mxu0
    %v860 = vadd.f32 0.0, %v859
    %v861 = vpop.f32.mrb[0].mxu0
    %v862 = vpop.f32.mrb[0].mxu0
    %v863 = vadd.f32 0.0, %v862
    %v864 = vpop.f32.mrb[0].mxu0
    %865 = vmatprep.mubr.bf16.mxu0 0
    %866 = vmatmul.mubr.bf16.gmra.mrb[0].mxu0 %v795
    %v867 = vpop.f32.mrb[0].mxu0
    %v868 = vadd.f32 0.0, %v867
    %v869 = vpop.f32.mrb[0].mxu0
    %v870 = vpop.f32.mrb[0].mxu0
    %v871 = vadd.f32 0.0, %v870
    %v872 = vpop.f32.mrb[0].mxu0
    %873 = vmatprep.mubr.bf16.mxu0 0
    %874 = vmatmul.mubr.bf16.gmra.mrb[0].mxu0 %v798
    %v875 = vpop.f32.mrb[0].mxu0
    %v876 = vadd.f32 0.0, %v875
    %v877 = vpop.f32.mrb[0].mxu0
    %v878 = vpop.f32.mrb[0].mxu0
    %v879 = vadd.f32 0.0, %v878
    %v880 = vpop.f32.mrb[0].mxu0
    %881 = vmatprep.mubr.bf16.mxu0 0
    %882 = vmatmul.mubr.bf16.gmra.mrb[0].mxu0 %v801
    %v883 = vpop.f32.mrb[0].mxu0
    %v884 = vadd.f32 0.0, %v883
    %v885 = vpop.f32.mrb[0].mxu0
    %v886 = vpop.f32.mrb[0].mxu0
    %v887 = vadd.f32 0.0, %v886
    %v888 = vpop.f32.mrb[0].mxu0
    %889 = vmatprep.mubr.bf16.mxu0 0
    %890 = vmatmul.mubr.bf16.gmra.mrb[0].mxu0 %v804
    %v891 = vpop.f32.mrb[0].mxu0
    %v892 = vadd.f32 0.0, %v891
    %v893 = vpop.f32.mrb[0].mxu0
    %v894 = vpop.f32.mrb[0].mxu0
    %v895 = vadd.f32 0.0, %v894
    %v896 = vpop.f32.mrb[0].mxu0
    %897 = vmatprep.mubr.bf16.mxu0 0
    %898 = vmatmul.mubr.bf16.gmra.mrb[0].mxu0 %v807
    %v899 = vpop.f32.mrb[0].mxu0
    %v900 = vadd.f32 0.0, %v899
    %v901 = vpop.f32.mrb[0].mxu0
    %v902 = vpop.f32.mrb[0].mxu0
    %v903 = vadd.f32 0.0, %v902
    %v904 = vpop.f32.mrb[0].mxu0
    %905 = vdwg.mxu0
    %v906 = vpack.c.bf16 %v847, %v844
    %v907 = vpack.c.bf16 %v855, %v852
    %v908 = vpack.c.bf16 %v863, %v860
    %v909 = vpack.c.bf16 %v871, %v868
    %v910 = vpack.c.bf16 %v879, %v876
    %v911 = vpack.c.bf16 %v887, %v884
    %v912 = vpack.c.bf16 %v895, %v892
    %v913 = vpack.c.bf16 %v903, %v900
    %914 = vmatprep.subr.bf16.mxu0 0
    %915 = vmatpush1.bf16.msra.mxu0 %v906
    %916 = vmatprep.subr.bf16.mxu0 0
    %917 = vmatpush1.bf16.msra.mxu0 %v907
    %918 = vmatprep.subr.bf16.mxu0 0
    %919 = vmatpush1.bf16.msra.mxu0 %v908
    %920 = vmatprep.subr.bf16.mxu0 0
    %921 = vmatpush1.bf16.msra.mxu0 %v909
    %922 = vmatprep.subr.bf16.mxu0 0
    %923 = vmatpush1.bf16.msra.mxu0 %v910
    %924 = vmatprep.subr.bf16.mxu0 0
    %925 = vmatpush1.bf16.msra.mxu0 %v911
    %926 = vmatprep.subr.bf16.mxu0 0
    %927 = vmatpush1.bf16.msra.mxu0 %v912
    %928 = vmatprep.subr.bf16.mxu0 0
    %929 = vmatpush1.bf16.msra.mxu0 %v913
    %930 = vmatprep.subr.bf16.mxu0 0
    %931 = vmatpush1.bf16.msra.mxu0 0
    %932 = vmatprep.subr.bf16.mxu0 0
    %933 = vmatpush1.bf16.msra.mxu0 0
    %934 = vmatprep.subr.bf16.mxu0 0
    %935 = vmatpush1.bf16.msra.mxu0 0
    %936 = vmatprep.subr.bf16.mxu0 0
    %937 = vmatpush1.bf16.msra.mxu0 0
    %938 = vmatprep.subr.bf16.mxu0 0
    %939 = vmatpush1.bf16.msra.mxu0 0
    %940 = vmatprep.subr.bf16.mxu0 0
    %941 = vmatpush1.bf16.msra.mxu0 0
    %942 = vmatprep.subr.bf16.mxu0 0
    %943 = vmatpush1.bf16.msra.mxu0 0
    %944 = vmatprep.subr.bf16.mxu0 0
    %945 = vmatpush1.bf16.msra.mxu0 0
    %946 = vmatprep.mubr.bf16.mxu0 0
    %947 = vmatmul.mubr.bf16.gmra.mrb[0].mxu0 %v93
    %v948 = vpop.f32.mrb[0].mxu0
    %v949 = vadd.f32 %v485, %v948
    %v950 = vpop.f32.mrb[0].mxu0
    %v951 = vpop.f32.mrb[0].mxu0
    %v952 = vadd.f32 %v485, %v951
    %v953 = vpop.f32.mrb[0].mxu0
    %954 = vmatprep.mubr.bf16.mxu0 0
    %955 = vmatmul.mubr.bf16.gmra.mrb[0].mxu0 %v94
    %v956 = vpop.f32.mrb[0].mxu0
    %v957 = vadd.f32 %v485, %v956
    %v958 = vpop.f32.mrb[0].mxu0
    %v959 = vpop.f32.mrb[0].mxu0
    %v960 = vadd.f32 %v485, %v959
    %v961 = vpop.f32.mrb[0].mxu0
    %962 = vmatprep.mubr.bf16.mxu0 0
    %963 = vmatmul.mubr.bf16.gmra.mrb[0].mxu0 %v95
    %v964 = vpop.f32.mrb[0].mxu0
    %v965 = vadd.f32 %v485, %v964
    %v966 = vpop.f32.mrb[0].mxu0
    %v967 = vpop.f32.mrb[0].mxu0
    %v968 = vadd.f32 %v485, %v967
    %v969 = vpop.f32.mrb[0].mxu0
    %970 = vmatprep.mubr.bf16.mxu0 0
    %971 = vmatmul.mubr.bf16.gmra.mrb[0].mxu0 %v96
    %v972 = vpop.f32.mrb[0].mxu0
    %v973 = vadd.f32 %v485, %v972
    %v974 = vpop.f32.mrb[0].mxu0
    %v975 = vpop.f32.mrb[0].mxu0
    %v976 = vadd.f32 %v485, %v975
    %v977 = vpop.f32.mrb[0].mxu0
    %978 = vmatprep.mubr.bf16.mxu0 0
    %979 = vmatmul.mubr.bf16.gmra.mrb[0].mxu0 %v97
    %v980 = vpop.f32.mrb[0].mxu0
    %v981 = vadd.f32 %v485, %v980
    %v982 = vpop.f32.mrb[0].mxu0
    %v983 = vpop.f32.mrb[0].mxu0
    %v984 = vadd.f32 %v485, %v983
    %v985 = vpop.f32.mrb[0].mxu0
    %986 = vmatprep.mubr.bf16.mxu0 0
    %987 = vmatmul.mubr.bf16.gmra.mrb[0].mxu0 %v98
    %v988 = vpop.f32.mrb[0].mxu0
    %v989 = vadd.f32 %v485, %v988
    %v990 = vpop.f32.mrb[0].mxu0
    %v991 = vpop.f32.mrb[0].mxu0
    %v992 = vadd.f32 %v485, %v991
    %v993 = vpop.f32.mrb[0].mxu0
    %994 = vmatprep.mubr.bf16.mxu0 0
    %995 = vmatmul.mubr.bf16.gmra.mrb[0].mxu0 %v99
    %v996 = vpop.f32.mrb[0].mxu0
    %v997 = vadd.f32 %v485, %v996
    %v998 = vpop.f32.mrb[0].mxu0
    %v999 = vpop.f32.mrb[0].mxu0
    %v1000 = vadd.f32 %v485, %v999
    %v1001 = vpop.f32.mrb[0].mxu0
    %1002 = vmatprep.mubr.bf16.mxu0 0
    %1003 = vmatmul.mubr.bf16.gmra.mrb[0].mxu0 %v100
    %v1004 = vpop.f32.mrb[0].mxu0
    %v1005 = vadd.f32 %v485, %v1004
    %v1006 = vpop.f32.mrb[0].mxu0
    %v1007 = vpop.f32.mrb[0].mxu0
    %v1008 = vadd.f32 %v485, %v1007
    %v1009 = vpop.f32.mrb[0].mxu0
    %1010 = vdwg.mxu0
    %v1011 = vadd.f32 %v949, %v761
    %v1012 = vadd.f32 %v952, %v762
    %v1013 = vadd.f32 %v957, %v763
    %v1014 = vadd.f32 %v960, %v764
    %v1015 = vadd.f32 %v965, %v765
    %v1016 = vadd.f32 %v968, %v766
    %v1017 = vadd.f32 %v973, %v767
    %v1018 = vadd.f32 %v976, %v768
    %v1019 = vadd.f32 %v981, %v769
    %v1020 = vadd.f32 %v984, %v770
    %v1021 = vadd.f32 %v989, %v771
    %v1022 = vadd.f32 %v992, %v772
    %v1023 = vadd.f32 %v997, %v773
    %v1024 = vadd.f32 %v1000, %v774
    %v1025 = vadd.f32 %v1005, %v775
    %v1026 = vadd.f32 %v1008, %v776
    %v1027 = vmax.f32 %v1011, 0.0
    %v1028 = vmax.f32 %v1012, 0.0
    %v1029 = vmax.f32 %v1013, 0.0
    %v1030 = vmax.f32 %v1014, 0.0
    %v1031 = vmax.f32 %v1015, 0.0
    %v1032 = vmax.f32 %v1016, 0.0
    %v1033 = vmax.f32 %v1017, 0.0
    %v1034 = vmax.f32 %v1018, 0.0
    %v1035 = vmax.f32 %v1019, 0.0
    %v1036 = vmax.f32 %v1020, 0.0
    %v1037 = vmax.f32 %v1021, 0.0
    %v1038 = vmax.f32 %v1022, 0.0
    %v1039 = vmax.f32 %v1023, 0.0
    %v1040 = vmax.f32 %v1024, 0.0
    %v1041 = vmax.f32 %v1025, 0.0
    %v1042 = vmax.f32 %v1026, 0.0
    %v1043 = vpack.c.bf16 %v1028, %v1027
    %v1044 = vpack.c.bf16 %v1030, %v1029
    %v1045 = vpack.c.bf16 %v1032, %v1031
    %v1046 = vpack.c.bf16 %v1034, %v1033
    %v1047 = vpack.c.bf16 %v1036, %v1035
    %v1048 = vpack.c.bf16 %v1038, %v1037
    %v1049 = vpack.c.bf16 %v1040, %v1039
    %v1050 = vpack.c.bf16 %v1042, %v1041
    %v1052 = vsel %vm334, %v1043, 0
    %v1055 = vsel %vm334, %v1044, 0
    %v1058 = vsel %vm334, %v1045, 0
    %v1061 = vsel %vm334, %v1046, 0
    %v1064 = vsel %vm334, %v1047, 0
    %v1067 = vsel %vm334, %v1048, 0
    %v1070 = vsel %vm334, %v1049, 0
    %v1073 = vsel %vm334, %v1050, 0
    %1075 = vmatprep.subr.bf16.mxu0 0
    %1076 = vmatpush1.bf16.msra.mxu0 %v511
    %1077 = vmatprep.subr.bf16.mxu0 0
    %1078 = vmatpush1.bf16.msra.mxu0 %v512
    %1079 = vmatprep.subr.bf16.mxu0 0
    %1080 = vmatpush1.bf16.msra.mxu0 %v513
    %1081 = vmatprep.subr.bf16.mxu0 0
    %1082 = vmatpush1.bf16.msra.mxu0 %v514
    %1083 = vmatprep.subr.bf16.mxu0 0
    %1084 = vmatpush1.bf16.msra.mxu0 0
    %1085 = vmatprep.subr.bf16.mxu0 0
    %1086 = vmatpush1.bf16.msra.mxu0 0
    %1087 = vmatprep.subr.bf16.mxu0 0
    %1088 = vmatpush1.bf16.msra.mxu0 0
    %1089 = vmatprep.subr.bf16.mxu0 0
    %1090 = vmatpush1.bf16.msra.mxu0 0
    %1091 = vmatprep.subr.bf16.mxu0 0
    %1092 = vmatpush1.bf16.msra.mxu0 0
    %1093 = vmatprep.subr.bf16.mxu0 0
    %1094 = vmatpush1.bf16.msra.mxu0 0
    %1095 = vmatprep.subr.bf16.mxu0 0
    %1096 = vmatpush1.bf16.msra.mxu0 0
    %1097 = vmatprep.subr.bf16.mxu0 0
    %1098 = vmatpush1.bf16.msra.mxu0 0
    %1099 = vmatprep.subr.bf16.mxu0 0
    %1100 = vmatpush1.bf16.msra.mxu0 0
    %1101 = vmatprep.subr.bf16.mxu0 0
    %1102 = vmatpush1.bf16.msra.mxu0 0
    %1103 = vmatprep.subr.bf16.mxu0 0
    %1104 = vmatpush1.bf16.msra.mxu0 0
    %1105 = vmatprep.subr.bf16.mxu0 0
    %1106 = vmatpush1.bf16.msra.mxu0 0
    %1107 = vmatprep.mubr.bf16.mxu0 0
    %1108 = vmatmul.mubr.bf16.gmra.mrb[0].mxu0 %v1052
    %v1109 = vpop.f32.mrb[0].mxu0
    %v1110 = vadd.f32 0.0, %v1109
    %v1111 = vpop.f32.mrb[0].mxu0
    %v1112 = vpop.f32.mrb[0].mxu0
    %v1113 = vadd.f32 0.0, %v1112
    %v1114 = vpop.f32.mrb[0].mxu0
    %1115 = vmatprep.mubr.bf16.mxu0 0
    %1116 = vmatmul.mubr.bf16.gmra.mrb[0].mxu0 %v1055
    %v1117 = vpop.f32.mrb[0].mxu0
    %v1118 = vadd.f32 0.0, %v1117
    %v1119 = vpop.f32.mrb[0].mxu0
    %v1120 = vpop.f32.mrb[0].mxu0
    %v1121 = vadd.f32 0.0, %v1120
    %v1122 = vpop.f32.mrb[0].mxu0
    %1123 = vmatprep.mubr.bf16.mxu0 0
    %1124 = vmatmul.mubr.bf16.gmra.mrb[0].mxu0 %v1058
    %v1125 = vpop.f32.mrb[0].mxu0
    %v1126 = vadd.f32 0.0, %v1125
    %v1127 = vpop.f32.mrb[0].mxu0
    %v1128 = vpop.f32.mrb[0].mxu0
    %v1129 = vadd.f32 0.0, %v1128
    %v1130 = vpop.f32.mrb[0].mxu0
    %1131 = vmatprep.mubr.bf16.mxu0 0
    %1132 = vmatmul.mubr.bf16.gmra.mrb[0].mxu0 %v1061
    %v1133 = vpop.f32.mrb[0].mxu0
    %v1134 = vadd.f32 0.0, %v1133
    %v1135 = vpop.f32.mrb[0].mxu0
    %v1136 = vpop.f32.mrb[0].mxu0
    %v1137 = vadd.f32 0.0, %v1136
    %v1138 = vpop.f32.mrb[0].mxu0
    %1139 = vmatprep.mubr.bf16.mxu0 0
    %1140 = vmatmul.mubr.bf16.gmra.mrb[0].mxu0 %v1064
    %v1141 = vpop.f32.mrb[0].mxu0
    %v1142 = vadd.f32 0.0, %v1141
    %v1143 = vpop.f32.mrb[0].mxu0
    %v1144 = vpop.f32.mrb[0].mxu0
    %v1145 = vadd.f32 0.0, %v1144
    %v1146 = vpop.f32.mrb[0].mxu0
    %1147 = vmatprep.mubr.bf16.mxu0 0
    %1148 = vmatmul.mubr.bf16.gmra.mrb[0].mxu0 %v1067
    %v1149 = vpop.f32.mrb[0].mxu0
    %v1150 = vadd.f32 0.0, %v1149
    %v1151 = vpop.f32.mrb[0].mxu0
    %v1152 = vpop.f32.mrb[0].mxu0
    %v1153 = vadd.f32 0.0, %v1152
    %v1154 = vpop.f32.mrb[0].mxu0
    %1155 = vmatprep.mubr.bf16.mxu0 0
    %1156 = vmatmul.mubr.bf16.gmra.mrb[0].mxu0 %v1070
    %v1157 = vpop.f32.mrb[0].mxu0
    %v1158 = vadd.f32 0.0, %v1157
    %v1159 = vpop.f32.mrb[0].mxu0
    %v1160 = vpop.f32.mrb[0].mxu0
    %v1161 = vadd.f32 0.0, %v1160
    %v1162 = vpop.f32.mrb[0].mxu0
    %1163 = vmatprep.mubr.bf16.mxu0 0
    %1164 = vmatmul.mubr.bf16.gmra.mrb[0].mxu0 %v1073
    %v1165 = vpop.f32.mrb[0].mxu0
    %v1166 = vadd.f32 0.0, %v1165
    %v1167 = vpop.f32.mrb[0].mxu0
    %v1168 = vpop.f32.mrb[0].mxu0
    %v1169 = vadd.f32 0.0, %v1168
    %v1170 = vpop.f32.mrb[0].mxu0
    %1171 = vdwg.mxu0
    %v1172 = vpack.c.bf16 %v1113, %v1110
    %v1173 = vpack.c.bf16 %v1121, %v1118
    %v1174 = vpack.c.bf16 %v1129, %v1126
    %v1175 = vpack.c.bf16 %v1137, %v1134
    %v1176 = vpack.c.bf16 %v1145, %v1142
    %v1177 = vpack.c.bf16 %v1153, %v1150
    %v1178 = vpack.c.bf16 %v1161, %v1158
    %v1179 = vpack.c.bf16 %v1169, %v1166
    %1180 = vmatprep.subr.bf16.mxu0 0
    %1181 = vmatpush1.bf16.msra.mxu0 %v1172
    %1182 = vmatprep.subr.bf16.mxu0 0
    %1183 = vmatpush1.bf16.msra.mxu0 %v1173
    %1184 = vmatprep.subr.bf16.mxu0 0
    %1185 = vmatpush1.bf16.msra.mxu0 %v1174
    %1186 = vmatprep.subr.bf16.mxu0 0
    %1187 = vmatpush1.bf16.msra.mxu0 %v1175
    %1188 = vmatprep.subr.bf16.mxu0 0
    %1189 = vmatpush1.bf16.msra.mxu0 %v1176
    %1190 = vmatprep.subr.bf16.mxu0 0
    %1191 = vmatpush1.bf16.msra.mxu0 %v1177
    %1192 = vmatprep.subr.bf16.mxu0 0
    %1193 = vmatpush1.bf16.msra.mxu0 %v1178
    %1194 = vmatprep.subr.bf16.mxu0 0
    %1195 = vmatpush1.bf16.msra.mxu0 %v1179
    %1196 = vmatprep.subr.bf16.mxu0 0
    %1197 = vmatpush1.bf16.msra.mxu0 0
    %1198 = vmatprep.subr.bf16.mxu0 0
    %1199 = vmatpush1.bf16.msra.mxu0 0
    %1200 = vmatprep.subr.bf16.mxu0 0
    %1201 = vmatpush1.bf16.msra.mxu0 0
    %1202 = vmatprep.subr.bf16.mxu0 0
    %1203 = vmatpush1.bf16.msra.mxu0 0
    %1204 = vmatprep.subr.bf16.mxu0 0
    %1205 = vmatpush1.bf16.msra.mxu0 0
    %1206 = vmatprep.subr.bf16.mxu0 0
    %1207 = vmatpush1.bf16.msra.mxu0 0
    %1208 = vmatprep.subr.bf16.mxu0 0
    %1209 = vmatpush1.bf16.msra.mxu0 0
    %1210 = vmatprep.subr.bf16.mxu0 0
    %1211 = vmatpush1.bf16.msra.mxu0 0
    %1212 = vmatprep.mubr.bf16.mxu0 0
    %1213 = vmatmul.mubr.bf16.gmra.mrb[0].mxu0 %v93
    %v1214 = vpop.f32.mrb[0].mxu0
    %v1215 = vadd.f32 %v485, %v1214
    %v1216 = vpop.f32.mrb[0].mxu0
    %v1217 = vpop.f32.mrb[0].mxu0
    %v1218 = vadd.f32 %v485, %v1217
    %v1219 = vpop.f32.mrb[0].mxu0
    %1220 = vmatprep.mubr.bf16.mxu0 0
    %1221 = vmatmul.mubr.bf16.gmra.mrb[0].mxu0 %v94
    %v1222 = vpop.f32.mrb[0].mxu0
    %v1223 = vadd.f32 %v485, %v1222
    %v1224 = vpop.f32.mrb[0].mxu0
    %v1225 = vpop.f32.mrb[0].mxu0
    %v1226 = vadd.f32 %v485, %v1225
    %v1227 = vpop.f32.mrb[0].mxu0
    %1228 = vmatprep.mubr.bf16.mxu0 0
    %1229 = vmatmul.mubr.bf16.gmra.mrb[0].mxu0 %v95
    %v1230 = vpop.f32.mrb[0].mxu0
    %v1231 = vadd.f32 %v485, %v1230
    %v1232 = vpop.f32.mrb[0].mxu0
    %v1233 = vpop.f32.mrb[0].mxu0
    %v1234 = vadd.f32 %v485, %v1233
    %v1235 = vpop.f32.mrb[0].mxu0
    %1236 = vmatprep.mubr.bf16.mxu0 0
    %1237 = vmatmul.mubr.bf16.gmra.mrb[0].mxu0 %v96
    %v1238 = vpop.f32.mrb[0].mxu0
    %v1239 = vadd.f32 %v485, %v1238
    %v1240 = vpop.f32.mrb[0].mxu0
    %v1241 = vpop.f32.mrb[0].mxu0
    %v1242 = vadd.f32 %v485, %v1241
    %v1243 = vpop.f32.mrb[0].mxu0
    %1244 = vmatprep.mubr.bf16.mxu0 0
    %1245 = vmatmul.mubr.bf16.gmra.mrb[0].mxu0 %v97
    %v1246 = vpop.f32.mrb[0].mxu0
    %v1247 = vadd.f32 %v485, %v1246
    %v1248 = vpop.f32.mrb[0].mxu0
    %v1249 = vpop.f32.mrb[0].mxu0
    %v1250 = vadd.f32 %v485, %v1249
    %v1251 = vpop.f32.mrb[0].mxu0
    %1252 = vmatprep.mubr.bf16.mxu0 0
    %1253 = vmatmul.mubr.bf16.gmra.mrb[0].mxu0 %v98
    %v1254 = vpop.f32.mrb[0].mxu0
    %v1255 = vadd.f32 %v485, %v1254
    %v1256 = vpop.f32.mrb[0].mxu0
    %v1257 = vpop.f32.mrb[0].mxu0
    %v1258 = vadd.f32 %v485, %v1257
    %v1259 = vpop.f32.mrb[0].mxu0
    %1260 = vmatprep.mubr.bf16.mxu0 0
    %1261 = vmatmul.mubr.bf16.gmra.mrb[0].mxu0 %v99
    %v1262 = vpop.f32.mrb[0].mxu0
    %v1263 = vadd.f32 %v485, %v1262
    %v1264 = vpop.f32.mrb[0].mxu0
    %v1265 = vpop.f32.mrb[0].mxu0
    %v1266 = vadd.f32 %v485, %v1265
    %v1267 = vpop.f32.mrb[0].mxu0
    %1268 = vmatprep.mubr.bf16.mxu0 0
    %1269 = vmatmul.mubr.bf16.gmra.mrb[0].mxu0 %v100
    %v1270 = vpop.f32.mrb[0].mxu0
    %v1271 = vadd.f32 %v485, %v1270
    %v1272 = vpop.f32.mrb[0].mxu0
    %v1273 = vpop.f32.mrb[0].mxu0
    %v1274 = vadd.f32 %v485, %v1273
    %v1275 = vpop.f32.mrb[0].mxu0
    %1276 = vdwg.mxu0
    %v1277 = vadd.f32 %v1215, %v1027
    %v1278 = vadd.f32 %v1218, %v1028
    %v1279 = vadd.f32 %v1223, %v1029
    %v1280 = vadd.f32 %v1226, %v1030
    %v1281 = vadd.f32 %v1231, %v1031
    %v1282 = vadd.f32 %v1234, %v1032
    %v1283 = vadd.f32 %v1239, %v1033
    %v1284 = vadd.f32 %v1242, %v1034
    %v1285 = vadd.f32 %v1247, %v1035
    %v1286 = vadd.f32 %v1250, %v1036
    %v1287 = vadd.f32 %v1255, %v1037
    %v1288 = vadd.f32 %v1258, %v1038
    %v1289 = vadd.f32 %v1263, %v1039
    %v1290 = vadd.f32 %v1266, %v1040
    %v1291 = vadd.f32 %v1271, %v1041
    %v1292 = vadd.f32 %v1274, %v1042
    %v1293 = vmax.f32 %v1277, 0.0
    %v1294 = vmax.f32 %v1278, 0.0
    %v1295 = vmax.f32 %v1279, 0.0
    %v1296 = vmax.f32 %v1280, 0.0
    %v1297 = vmax.f32 %v1281, 0.0
    %v1298 = vmax.f32 %v1282, 0.0
    %v1299 = vmax.f32 %v1283, 0.0
    %v1300 = vmax.f32 %v1284, 0.0
    %v1301 = vmax.f32 %v1285, 0.0
    %v1302 = vmax.f32 %v1286, 0.0
    %v1303 = vmax.f32 %v1287, 0.0
    %v1304 = vmax.f32 %v1288, 0.0
    %v1305 = vmax.f32 %v1289, 0.0
    %v1306 = vmax.f32 %v1290, 0.0
    %v1307 = vmax.f32 %v1291, 0.0
    %v1308 = vmax.f32 %v1292, 0.0
    %v1309 = vpack.c.bf16 %v1294, %v1293
    %v1310 = vpack.c.bf16 %v1296, %v1295
    %v1311 = vpack.c.bf16 %v1298, %v1297
    %v1312 = vpack.c.bf16 %v1300, %v1299
    %v1313 = vpack.c.bf16 %v1302, %v1301
    %v1314 = vpack.c.bf16 %v1304, %v1303
    %v1315 = vpack.c.bf16 %v1306, %v1305
    %v1316 = vpack.c.bf16 %v1308, %v1307
    %v1318 = vsel %vm334, %v1309, 0
    %v1321 = vsel %vm334, %v1310, 0
    %v1324 = vsel %vm334, %v1311, 0
    %v1327 = vsel %vm334, %v1312, 0
    %v1330 = vsel %vm334, %v1313, 0
    %v1333 = vsel %vm334, %v1314, 0
    %v1336 = vsel %vm334, %v1315, 0
    %v1339 = vsel %vm334, %v1316, 0
    %1341 = vmatprep.subr.bf16.mxu0 0
    %1342 = vmatpush1.bf16.msra.mxu0 %v511
    %1343 = vmatprep.subr.bf16.mxu0 0
    %1344 = vmatpush1.bf16.msra.mxu0 %v512
    %1345 = vmatprep.subr.bf16.mxu0 0
    %1346 = vmatpush1.bf16.msra.mxu0 %v513
    %1347 = vmatprep.subr.bf16.mxu0 0
    %1348 = vmatpush1.bf16.msra.mxu0 %v514
    %1349 = vmatprep.subr.bf16.mxu0 0
    %1350 = vmatpush1.bf16.msra.mxu0 0
    %1351 = vmatprep.subr.bf16.mxu0 0
    %1352 = vmatpush1.bf16.msra.mxu0 0
    %1353 = vmatprep.subr.bf16.mxu0 0
    %1354 = vmatpush1.bf16.msra.mxu0 0
    %1355 = vmatprep.subr.bf16.mxu0 0
    %1356 = vmatpush1.bf16.msra.mxu0 0
    %1357 = vmatprep.subr.bf16.mxu0 0
    %1358 = vmatpush1.bf16.msra.mxu0 0
    %1359 = vmatprep.subr.bf16.mxu0 0
    %1360 = vmatpush1.bf16.msra.mxu0 0
    %1361 = vmatprep.subr.bf16.mxu0 0
    %1362 = vmatpush1.bf16.msra.mxu0 0
    %1363 = vmatprep.subr.bf16.mxu0 0
    %1364 = vmatpush1.bf16.msra.mxu0 0
    %1365 = vmatprep.subr.bf16.mxu0 0
    %1366 = vmatpush1.bf16.msra.mxu0 0
    %1367 = vmatprep.subr.bf16.mxu0 0
    %1368 = vmatpush1.bf16.msra.mxu0 0
    %1369 = vmatprep.subr.bf16.mxu0 0
    %1370 = vmatpush1.bf16.msra.mxu0 0
    %1371 = vmatprep.subr.bf16.mxu0 0
    %1372 = vmatpush1.bf16.msra.mxu0 0
    %1373 = vmatprep.mubr.bf16.mxu0 0
    %1374 = vmatmul.mubr.bf16.gmra.mrb[0].mxu0 %v1318
    %v1375 = vpop.f32.mrb[0].mxu0
    %v1376 = vadd.f32 0.0, %v1375
    %v1377 = vpop.f32.mrb[0].mxu0
    %v1378 = vpop.f32.mrb[0].mxu0
    %v1379 = vadd.f32 0.0, %v1378
    %v1380 = vpop.f32.mrb[0].mxu0
    %1381 = vmatprep.mubr.bf16.mxu0 0
    %1382 = vmatmul.mubr.bf16.gmra.mrb[0].mxu0 %v1321
    %v1383 = vpop.f32.mrb[0].mxu0
    %v1384 = vadd.f32 0.0, %v1383
    %v1385 = vpop.f32.mrb[0].mxu0
    %v1386 = vpop.f32.mrb[0].mxu0
    %v1387 = vadd.f32 0.0, %v1386
    %v1388 = vpop.f32.mrb[0].mxu0
    %1389 = vmatprep.mubr.bf16.mxu0 0
    %1390 = vmatmul.mubr.bf16.gmra.mrb[0].mxu0 %v1324
    %v1391 = vpop.f32.mrb[0].mxu0
    %v1392 = vadd.f32 0.0, %v1391
    %v1393 = vpop.f32.mrb[0].mxu0
    %v1394 = vpop.f32.mrb[0].mxu0
    %v1395 = vadd.f32 0.0, %v1394
    %v1396 = vpop.f32.mrb[0].mxu0
    %1397 = vmatprep.mubr.bf16.mxu0 0
    %1398 = vmatmul.mubr.bf16.gmra.mrb[0].mxu0 %v1327
    %v1399 = vpop.f32.mrb[0].mxu0
    %v1400 = vadd.f32 0.0, %v1399
    %v1401 = vpop.f32.mrb[0].mxu0
    %v1402 = vpop.f32.mrb[0].mxu0
    %v1403 = vadd.f32 0.0, %v1402
    %v1404 = vpop.f32.mrb[0].mxu0
    %1405 = vmatprep.mubr.bf16.mxu0 0
    %1406 = vmatmul.mubr.bf16.gmra.mrb[0].mxu0 %v1330
    %v1407 = vpop.f32.mrb[0].mxu0
    %v1408 = vadd.f32 0.0, %v1407
    %v1409 = vpop.f32.mrb[0].mxu0
    %v1410 = vpop.f32.mrb[0].mxu0
    %v1411 = vadd.f32 0.0, %v1410
    %v1412 = vpop.f32.mrb[0].mxu0
    %1413 = vmatprep.mubr.bf16.mxu0 0
    %1414 = vmatmul.mubr.bf16.gmra.mrb[0].mxu0 %v1333
    %v1415 = vpop.f32.mrb[0].mxu0
    %v1416 = vadd.f32 0.0, %v1415
    %v1417 = vpop.f32.mrb[0].mxu0
    %v1418 = vpop.f32.mrb[0].mxu0
    %v1419 = vadd.f32 0.0, %v1418
    %v1420 = vpop.f32.mrb[0].mxu0
    %1421 = vmatprep.mubr.bf16.mxu0 0
    %1422 = vmatmul.mubr.bf16.gmra.mrb[0].mxu0 %v1336
    %v1423 = vpop.f32.mrb[0].mxu0
    %v1424 = vadd.f32 0.0, %v1423
    %v1425 = vpop.f32.mrb[0].mxu0
    %v1426 = vpop.f32.mrb[0].mxu0
    %v1427 = vadd.f32 0.0, %v1426
    %v1428 = vpop.f32.mrb[0].mxu0
    %1429 = vmatprep.mubr.bf16.mxu0 0
    %1430 = vmatmul.mubr.bf16.gmra.mrb[0].mxu0 %v1339
    %v1431 = vpop.f32.mrb[0].mxu0
    %v1432 = vadd.f32 0.0, %v1431
    %v1433 = vpop.f32.mrb[0].mxu0
    %v1434 = vpop.f32.mrb[0].mxu0
    %v1435 = vadd.f32 0.0, %v1434
    %v1436 = vpop.f32.mrb[0].mxu0
    %1437 = vdwg.mxu0
    %v1438 = vpack.c.bf16 %v1379, %v1376
    %v1439 = vpack.c.bf16 %v1387, %v1384
    %v1440 = vpack.c.bf16 %v1395, %v1392
    %v1441 = vpack.c.bf16 %v1403, %v1400
    %v1442 = vpack.c.bf16 %v1411, %v1408
    %v1443 = vpack.c.bf16 %v1419, %v1416
    %v1444 = vpack.c.bf16 %v1427, %v1424
    %v1445 = vpack.c.bf16 %v1435, %v1432
    %1446 = vmatprep.subr.bf16.mxu0 0
    %1447 = vmatpush1.bf16.msra.mxu0 %v1438
    %1448 = vmatprep.subr.bf16.mxu0 0
    %1449 = vmatpush1.bf16.msra.mxu0 %v1439
    %1450 = vmatprep.subr.bf16.mxu0 0
    %1451 = vmatpush1.bf16.msra.mxu0 %v1440
    %1452 = vmatprep.subr.bf16.mxu0 0
    %1453 = vmatpush1.bf16.msra.mxu0 %v1441
    %1454 = vmatprep.subr.bf16.mxu0 0
    %1455 = vmatpush1.bf16.msra.mxu0 %v1442
    %1456 = vmatprep.subr.bf16.mxu0 0
    %1457 = vmatpush1.bf16.msra.mxu0 %v1443
    %1458 = vmatprep.subr.bf16.mxu0 0
    %1459 = vmatpush1.bf16.msra.mxu0 %v1444
    %1460 = vmatprep.subr.bf16.mxu0 0
    %1461 = vmatpush1.bf16.msra.mxu0 %v1445
    %1462 = vmatprep.subr.bf16.mxu0 0
    %1463 = vmatpush1.bf16.msra.mxu0 0
    %1464 = vmatprep.subr.bf16.mxu0 0
    %1465 = vmatpush1.bf16.msra.mxu0 0
    %1466 = vmatprep.subr.bf16.mxu0 0
    %1467 = vmatpush1.bf16.msra.mxu0 0
    %1468 = vmatprep.subr.bf16.mxu0 0
    %1469 = vmatpush1.bf16.msra.mxu0 0
    %1470 = vmatprep.subr.bf16.mxu0 0
    %1471 = vmatpush1.bf16.msra.mxu0 0
    %1472 = vmatprep.subr.bf16.mxu0 0
    %1473 = vmatpush1.bf16.msra.mxu0 0
    %1474 = vmatprep.subr.bf16.mxu0 0
    %1475 = vmatpush1.bf16.msra.mxu0 0
    %1476 = vmatprep.subr.bf16.mxu0 0
    %1477 = vmatpush1.bf16.msra.mxu0 0
    %1478 = vmatprep.mubr.bf16.mxu0 0
    %1479 = vmatmul.mubr.bf16.gmra.mrb[0].mxu0 %v93
    %v1480 = vpop.f32.mrb[0].mxu0
    %v1481 = vadd.f32 %v485, %v1480
    %v1482 = vpop.f32.mrb[0].mxu0
    %v1483 = vpop.f32.mrb[0].mxu0
    %v1484 = vadd.f32 %v485, %v1483
    %v1485 = vpop.f32.mrb[0].mxu0
    %1486 = vmatprep.mubr.bf16.mxu0 0
    %1487 = vmatmul.mubr.bf16.gmra.mrb[0].mxu0 %v94
    %v1488 = vpop.f32.mrb[0].mxu0
    %v1489 = vadd.f32 %v485, %v1488
    %v1490 = vpop.f32.mrb[0].mxu0
    %v1491 = vpop.f32.mrb[0].mxu0
    %v1492 = vadd.f32 %v485, %v1491
    %v1493 = vpop.f32.mrb[0].mxu0
    %1494 = vmatprep.mubr.bf16.mxu0 0
    %1495 = vmatmul.mubr.bf16.gmra.mrb[0].mxu0 %v95
    %v1496 = vpop.f32.mrb[0].mxu0
    %v1497 = vadd.f32 %v485, %v1496
    %v1498 = vpop.f32.mrb[0].mxu0
    %v1499 = vpop.f32.mrb[0].mxu0
    %v1500 = vadd.f32 %v485, %v1499
    %v1501 = vpop.f32.mrb[0].mxu0
    %1502 = vmatprep.mubr.bf16.mxu0 0
    %1503 = vmatmul.mubr.bf16.gmra.mrb[0].mxu0 %v96
    %v1504 = vpop.f32.mrb[0].mxu0
    %v1505 = vadd.f32 %v485, %v1504
    %v1506 = vpop.f32.mrb[0].mxu0
    %v1507 = vpop.f32.mrb[0].mxu0
    %v1508 = vadd.f32 %v485, %v1507
    %v1509 = vpop.f32.mrb[0].mxu0
    %1510 = vmatprep.mubr.bf16.mxu0 0
    %1511 = vmatmul.mubr.bf16.gmra.mrb[0].mxu0 %v97
    %v1512 = vpop.f32.mrb[0].mxu0
    %v1513 = vadd.f32 %v485, %v1512
    %v1514 = vpop.f32.mrb[0].mxu0
    %v1515 = vpop.f32.mrb[0].mxu0
    %v1516 = vadd.f32 %v485, %v1515
    %v1517 = vpop.f32.mrb[0].mxu0
    %1518 = vmatprep.mubr.bf16.mxu0 0
    %1519 = vmatmul.mubr.bf16.gmra.mrb[0].mxu0 %v98
    %v1520 = vpop.f32.mrb[0].mxu0
    %v1521 = vadd.f32 %v485, %v1520
    %v1522 = vpop.f32.mrb[0].mxu0
    %v1523 = vpop.f32.mrb[0].mxu0
    %v1524 = vadd.f32 %v485, %v1523
    %v1525 = vpop.f32.mrb[0].mxu0
    %1526 = vmatprep.mubr.bf16.mxu0 0
    %1527 = vmatmul.mubr.bf16.gmra.mrb[0].mxu0 %v99
    %v1528 = vpop.f32.mrb[0].mxu0
    %v1529 = vadd.f32 %v485, %v1528
    %v1530 = vpop.f32.mrb[0].mxu0
    %v1531 = vpop.f32.mrb[0].mxu0
    %v1532 = vadd.f32 %v485, %v1531
    %v1533 = vpop.f32.mrb[0].mxu0
    %1534 = vmatprep.mubr.bf16.mxu0 0
    %1535 = vmatmul.mubr.bf16.gmra.mrb[0].mxu0 %v100
    %v1536 = vpop.f32.mrb[0].mxu0
    %v1537 = vadd.f32 %v485, %v1536
    %v1538 = vpop.f32.mrb[0].mxu0
    %v1539 = vpop.f32.mrb[0].mxu0
    %v1540 = vadd.f32 %v485, %v1539
    %v1541 = vpop.f32.mrb[0].mxu0
    %1542 = vdwg.mxu0
    %v1543 = vadd.f32 %v1481, %v1293
    %v1544 = vadd.f32 %v1484, %v1294
    %v1545 = vadd.f32 %v1489, %v1295
    %v1546 = vadd.f32 %v1492, %v1296
    %v1547 = vadd.f32 %v1497, %v1297
    %v1548 = vadd.f32 %v1500, %v1298
    %v1549 = vadd.f32 %v1505, %v1299
    %v1550 = vadd.f32 %v1508, %v1300
    %v1551 = vadd.f32 %v1513, %v1301
    %v1552 = vadd.f32 %v1516, %v1302
    %v1553 = vadd.f32 %v1521, %v1303
    %v1554 = vadd.f32 %v1524, %v1304
    %v1555 = vadd.f32 %v1529, %v1305
    %v1556 = vadd.f32 %v1532, %v1306
    %v1557 = vadd.f32 %v1537, %v1307
    %v1558 = vadd.f32 %v1540, %v1308
    %v1559 = vmax.f32 %v1543, 0.0
    %v1560 = vmax.f32 %v1544, 0.0
    %v1561 = vmax.f32 %v1545, 0.0
    %v1562 = vmax.f32 %v1546, 0.0
    %v1563 = vmax.f32 %v1547, 0.0
    %v1564 = vmax.f32 %v1548, 0.0
    %v1565 = vmax.f32 %v1549, 0.0
    %v1566 = vmax.f32 %v1550, 0.0
    %v1567 = vmax.f32 %v1551, 0.0
    %v1568 = vmax.f32 %v1552, 0.0
    %v1569 = vmax.f32 %v1553, 0.0
    %v1570 = vmax.f32 %v1554, 0.0
    %v1571 = vmax.f32 %v1555, 0.0
    %v1572 = vmax.f32 %v1556, 0.0
    %v1573 = vmax.f32 %v1557, 0.0
    %v1574 = vmax.f32 %v1558, 0.0
    %v1575 = vpack.c.bf16 %v1560, %v1559
    %v1576 = vpack.c.bf16 %v1562, %v1561
    %v1577 = vpack.c.bf16 %v1564, %v1563
    %v1578 = vpack.c.bf16 %v1566, %v1565
    %v1579 = vpack.c.bf16 %v1568, %v1567
    %v1580 = vpack.c.bf16 %v1570, %v1569
    %v1581 = vpack.c.bf16 %v1572, %v1571
    %v1582 = vpack.c.bf16 %v1574, %v1573
    %1583 = vmatprep.subr.bf16.mxu0 0
    %1584 = vmatpush1.bf16.msra.mxu0 %v1575
    %1585 = vmatprep.subr.bf16.mxu0 0
    %1586 = vmatpush1.bf16.msra.mxu0 %v1576
    %1587 = vmatprep.subr.bf16.mxu0 0
    %1588 = vmatpush1.bf16.msra.mxu0 %v1577
    %1589 = vmatprep.subr.bf16.mxu0 0
    %1590 = vmatpush1.bf16.msra.mxu0 %v1578
    %1591 = vmatprep.subr.bf16.mxu0 0
    %1592 = vmatpush1.bf16.msra.mxu0 %v1579
    %1593 = vmatprep.subr.bf16.mxu0 0
    %1594 = vmatpush1.bf16.msra.mxu0 %v1580
    %1595 = vmatprep.subr.bf16.mxu0 0
    %1596 = vmatpush1.bf16.msra.mxu0 %v1581
    %1597 = vmatprep.subr.bf16.mxu0 0
    %1598 = vmatpush1.bf16.msra.mxu0 %v1582
    %1599 = vmatprep.subr.bf16.mxu0 0
    %1600 = vmatpush1.bf16.msra.mxu0 0
    %1601 = vmatprep.subr.bf16.mxu0 0
    %1602 = vmatpush1.bf16.msra.mxu0 0
    %1603 = vmatprep.subr.bf16.mxu0 0
    %1604 = vmatpush1.bf16.msra.mxu0 0
    %1605 = vmatprep.subr.bf16.mxu0 0
    %1606 = vmatpush1.bf16.msra.mxu0 0
    %1607 = vmatprep.subr.bf16.mxu0 0
    %1608 = vmatpush1.bf16.msra.mxu0 0
    %1609 = vmatprep.subr.bf16.mxu0 0
    %1610 = vmatpush1.bf16.msra.mxu0 0
    %1611 = vmatprep.subr.bf16.mxu0 0
    %1612 = vmatpush1.bf16.msra.mxu0 0
    %1613 = vmatprep.subr.bf16.mxu0 0
    %1614 = vmatpush1.bf16.msra.mxu0 0
    %1615 = vmatprep.mubr.bf16.mxu0 0
    %1616 = vmatmul.mubr.bf16.gmra.mrb[0].mxu0 %v93
    %v1617 = vpop.f32.mrb[0].mxu0
    %v1618 = vadd.f32 0.0, %v1617
    %v1619 = vpop.f32.mrb[0].mxu0
    %v1620 = vpop.f32.mrb[0].mxu0
    %v1621 = vadd.f32 0.0, %v1620
    %v1622 = vpop.f32.mrb[0].mxu0
    %1623 = vmatprep.mubr.bf16.mxu0 0
    %1624 = vmatmul.mubr.bf16.gmra.mrb[0].mxu0 %v94
    %v1625 = vpop.f32.mrb[0].mxu0
    %v1626 = vadd.f32 0.0, %v1625
    %v1627 = vpop.f32.mrb[0].mxu0
    %v1628 = vpop.f32.mrb[0].mxu0
    %v1629 = vadd.f32 0.0, %v1628
    %v1630 = vpop.f32.mrb[0].mxu0
    %1631 = vmatprep.mubr.bf16.mxu0 0
    %1632 = vmatmul.mubr.bf16.gmra.mrb[0].mxu0 %v95
    %v1633 = vpop.f32.mrb[0].mxu0
    %v1634 = vadd.f32 0.0, %v1633
    %v1635 = vpop.f32.mrb[0].mxu0
    %v1636 = vpop.f32.mrb[0].mxu0
    %v1637 = vadd.f32 0.0, %v1636
    %v1638 = vpop.f32.mrb[0].mxu0
    %1639 = vmatprep.mubr.bf16.mxu0 0
    %1640 = vmatmul.mubr.bf16.gmra.mrb[0].mxu0 %v96
    %v1641 = vpop.f32.mrb[0].mxu0
    %v1642 = vadd.f32 0.0, %v1641
    %v1643 = vpop.f32.mrb[0].mxu0
    %v1644 = vpop.f32.mrb[0].mxu0
    %v1645 = vadd.f32 0.0, %v1644
    %v1646 = vpop.f32.mrb[0].mxu0
    %1647 = vmatprep.mubr.bf16.mxu0 0
    %1648 = vmatmul.mubr.bf16.gmra.mrb[0].mxu0 %v97
    %v1649 = vpop.f32.mrb[0].mxu0
    %v1650 = vadd.f32 0.0, %v1649
    %v1651 = vpop.f32.mrb[0].mxu0
    %v1652 = vpop.f32.mrb[0].mxu0
    %v1653 = vadd.f32 0.0, %v1652
    %v1654 = vpop.f32.mrb[0].mxu0
    %1655 = vmatprep.mubr.bf16.mxu0 0
    %1656 = vmatmul.mubr.bf16.gmra.mrb[0].mxu0 %v98
    %v1657 = vpop.f32.mrb[0].mxu0
    %v1658 = vadd.f32 0.0, %v1657
    %v1659 = vpop.f32.mrb[0].mxu0
    %v1660 = vpop.f32.mrb[0].mxu0
    %v1661 = vadd.f32 0.0, %v1660
    %v1662 = vpop.f32.mrb[0].mxu0
    %1663 = vmatprep.mubr.bf16.mxu0 0
    %1664 = vmatmul.mubr.bf16.gmra.mrb[0].mxu0 %v99
    %v1665 = vpop.f32.mrb[0].mxu0
    %v1666 = vadd.f32 0.0, %v1665
    %v1667 = vpop.f32.mrb[0].mxu0
    %v1668 = vpop.f32.mrb[0].mxu0
    %v1669 = vadd.f32 0.0, %v1668
    %v1670 = vpop.f32.mrb[0].mxu0
    %1671 = vmatprep.mubr.bf16.mxu0 0
    %1672 = vmatmul.mubr.bf16.gmra.mrb[0].mxu0 %v100
    %v1673 = vpop.f32.mrb[0].mxu0
    %v1674 = vadd.f32 0.0, %v1673
    %v1675 = vpop.f32.mrb[0].mxu0
    %v1676 = vpop.f32.mrb[0].mxu0
    %v1677 = vadd.f32 0.0, %v1676
    %v1678 = vpop.f32.mrb[0].mxu0
    %1679 = vdwg.mxu0
    %1696 = vrot.lane.b32.xlu0 %v1559, 64
    %v1697 = vpop.permute.xlu0 %1696
    %1698 = vrot.lane.b32.xlu0 %v1560, 64
    %v1699 = vpop.permute.xlu0 %1698
    %1700 = vrot.lane.b32.xlu0 %v1561, 64
    %v1701 = vpop.permute.xlu0 %1700
    %1702 = vrot.lane.b32.xlu0 %v1562, 64
    %v1703 = vpop.permute.xlu0 %1702
    %1704 = vrot.lane.b32.xlu0 %v1563, 64
    %v1705 = vpop.permute.xlu0 %1704
    %1706 = vrot.lane.b32.xlu0 %v1564, 64
    %v1707 = vpop.permute.xlu0 %1706
    %1708 = vrot.lane.b32.xlu0 %v1565, 64
    %v1709 = vpop.permute.xlu0 %1708
    %1710 = vrot.lane.b32.xlu0 %v1566, 64
    %v1711 = vpop.permute.xlu0 %1710
    %1712 = vrot.lane.b32.xlu0 %v1567, 64
    %v1713 = vpop.permute.xlu0 %1712
    %1714 = vrot.lane.b32.xlu0 %v1568, 64
    %v1715 = vpop.permute.xlu0 %1714
    %1716 = vrot.lane.b32.xlu0 %v1569, 64
    %v1717 = vpop.permute.xlu0 %1716
    %1718 = vrot.lane.b32.xlu0 %v1570, 64
    %v1719 = vpop.permute.xlu0 %1718
    %1720 = vrot.lane.b32.xlu0 %v1571, 64
    %v1721 = vpop.permute.xlu0 %1720
    %1722 = vrot.lane.b32.xlu0 %v1572, 64
    %v1723 = vpop.permute.xlu0 %1722
    %1724 = vrot.lane.b32.xlu0 %v1573, 64
    %v1725 = vpop.permute.xlu0 %1724
    %1726 = vrot.lane.b32.xlu0 %v1574, 64
    %v1727 = vpop.permute.xlu0 %1726
    %v1744 = vsel %vm334, %v1618, %v1697
    %v1745 = vsel %vm334, %v1621, %v1699
    %v1746 = vsel %vm334, %v1626, %v1701
    %v1747 = vsel %vm334, %v1629, %v1703
    %v1748 = vsel %vm334, %v1634, %v1705
    %v1749 = vsel %vm334, %v1637, %v1707
    %v1750 = vsel %vm334, %v1642, %v1709
    %v1751 = vsel %vm334, %v1645, %v1711
    %v1752 = vsel %vm334, %v1650, %v1713
    %v1753 = vsel %vm334, %v1653, %v1715
    %v1754 = vsel %vm334, %v1658, %v1717
    %v1755 = vsel %vm334, %v1661, %v1719
    %v1756 = vsel %vm334, %v1666, %v1721
    %v1757 = vsel %vm334, %v1669, %v1723
    %v1758 = vsel %vm334, %v1674, %v1725
    %v1759 = vsel %vm334, %v1677, %v1727
    %v1760 = vpack.c.bf16 %v1745, %v1744
    %v1761 = vpack.c.bf16 %v1747, %v1746
    %v1762 = vpack.c.bf16 %v1749, %v1748
    %v1763 = vpack.c.bf16 %v1751, %v1750
    %v1764 = vpack.c.bf16 %v1753, %v1752
    %v1765 = vpack.c.bf16 %v1755, %v1754
    %v1766 = vpack.c.bf16 %v1757, %v1756
    %v1767 = vpack.c.bf16 %v1759, %v1758
    %v1768 = vld [vmem:[#allocation4] sm:$0xf]
    %v1769 = vld [vmem:[#allocation4 + $0x4] sm:$0xf]
    %v1770 = vld [vmem:[#allocation4 + $0x8] sm:$0xf]
    %v1771 = vld [vmem:[#allocation4 + $0xc] sm:$0xf]
    %v1772 = vld [vmem:[#allocation4 + $0x10] sm:$0xf]
    %v1773 = vld [vmem:[#allocation4 + $0x14] sm:$0xf]
    %v1774 = vld [vmem:[#allocation4 + $0x18] sm:$0xf]
    %v1775 = vld [vmem:[#allocation4 + $0x1c] sm:$0xf]
    %v1776 = vld [vmem:[#allocation4 + $0x20] sm:$0xf]
    %v1777 = vld [vmem:[#allocation4 + $0x24] sm:$0xf]
    %v1778 = vld [vmem:[#allocation4 + $0x28] sm:$0xf]
    %v1779 = vld [vmem:[#allocation4 + $0x2c] sm:$0xf]
    %v1780 = vld [vmem:[#allocation4 + $0x30] sm:$0xf]
    %v1781 = vld [vmem:[#allocation4 + $0x34] sm:$0xf]
    %v1782 = vld [vmem:[#allocation4 + $0x38] sm:$0xf]
    %v1783 = vld [vmem:[#allocation4 + $0x3c] sm:$0xf]
    %v1784 = vld [vmem:[%s7] sm:$0x1]
    %v1786 = vlaneseq
    %v1787 = vshrl.u32 %v1786, 7
    %v1788 = vsub.s32 0, %v1787
    %v1789 = vrot.slane %v1784, %v1788
    %v1807 = vunpack.c.l.b16 %v1768
    %v1808 = vunpack.c.l.b16 %v1769
    %v1809 = vunpack.c.l.b16 %v1770
    %v1810 = vunpack.c.l.b16 %v1771
    %v1811 = vunpack.c.l.b16 %v1772
    %v1812 = vunpack.c.l.b16 %v1773
    %v1813 = vunpack.c.l.b16 %v1774
    %v1814 = vunpack.c.l.b16 %v1775
    %v1815 = vunpack.c.l.b16 %v1776
    %v1816 = vunpack.c.l.b16 %v1777
    %v1817 = vunpack.c.l.b16 %v1778
    %v1818 = vunpack.c.l.b16 %v1779
    %v1819 = vunpack.c.l.b16 %v1780
    %v1820 = vunpack.c.l.b16 %v1781
    %v1821 = vunpack.c.l.b16 %v1782
    %v1822 = vunpack.c.l.b16 %v1783
    %v1823 = vpack.c.b16 %v1808, %v1807
    %v1824 = vpack.c.b16 %v1810, %v1809
    %v1825 = vpack.c.b16 %v1812, %v1811
    %v1826 = vpack.c.b16 %v1814, %v1813
    %v1827 = vpack.c.b16 %v1816, %v1815
    %v1828 = vpack.c.b16 %v1818, %v1817
    %v1829 = vpack.c.b16 %v1820, %v1819
    %v1830 = vpack.c.b16 %v1822, %v1821
    %1839 = vmatprep.subr.bf16.mxu0 0
    %1840 = vmatpush1.bf16.msra.mxu0 %v1823
    %1841 = vmatprep.subr.bf16.mxu0 0
    %1842 = vmatpush1.bf16.msra.mxu0 %v1824
    %1843 = vmatprep.subr.bf16.mxu0 0
    %1844 = vmatpush1.bf16.msra.mxu0 %v1825
    %1845 = vmatprep.subr.bf16.mxu0 0
    %1846 = vmatpush1.bf16.msra.mxu0 %v1826
    %1847 = vmatprep.subr.bf16.mxu0 0
    %1848 = vmatpush1.bf16.msra.mxu0 %v1827
    %1849 = vmatprep.subr.bf16.mxu0 0
    %1850 = vmatpush1.bf16.msra.mxu0 %v1828
    %1851 = vmatprep.subr.bf16.mxu0 0
    %1852 = vmatpush1.bf16.msra.mxu0 %v1829
    %1853 = vmatprep.subr.bf16.mxu0 0
    %1854 = vmatpush1.bf16.msra.mxu0 %v1830
    %1855 = vmatprep.subr.bf16.mxu0 0
    %1856 = vmatpush1.bf16.msra.mxu0 0
    %1857 = vmatprep.subr.bf16.mxu0 0
    %1858 = vmatpush1.bf16.msra.mxu0 0
    %1859 = vmatprep.subr.bf16.mxu0 0
    %1860 = vmatpush1.bf16.msra.mxu0 0
    %1861 = vmatprep.subr.bf16.mxu0 0
    %1862 = vmatpush1.bf16.msra.mxu0 0
    %1863 = vmatprep.subr.bf16.mxu0 0
    %1864 = vmatpush1.bf16.msra.mxu0 0
    %1865 = vmatprep.subr.bf16.mxu0 0
    %1866 = vmatpush1.bf16.msra.mxu0 0
    %1867 = vmatprep.subr.bf16.mxu0 0
    %1868 = vmatpush1.bf16.msra.mxu0 0
    %1869 = vmatprep.subr.bf16.mxu0 0
    %1870 = vmatpush1.bf16.msra.mxu0 0
    %1871 = vmatprep.mubr.bf16.mxu0 0
    %1872 = vmatmul.mubr.bf16.gmra.mrb[0].mxu0 %v1760
    %v1873 = vpop.f32.mrb[0].mxu0
    %v1874 = vadd.f32 %v1789, %v1873
    %v1875 = vpop.f32.mrb[0].mxu0
    %v1876 = vpop.f32.mrb[0].mxu0
    %v1877 = vadd.f32 %v1789, %v1876
    %v1878 = vpop.f32.mrb[0].mxu0
    %1879 = vmatprep.mubr.bf16.mxu0 0
    %1880 = vmatmul.mubr.bf16.gmra.mrb[0].mxu0 %v1761
    %v1881 = vpop.f32.mrb[0].mxu0
    %v1882 = vadd.f32 %v1789, %v1881
    %v1883 = vpop.f32.mrb[0].mxu0
    %v1884 = vpop.f32.mrb[0].mxu0
    %v1885 = vadd.f32 %v1789, %v1884
    %v1886 = vpop.f32.mrb[0].mxu0
    %1887 = vmatprep.mubr.bf16.mxu0 0
    %1888 = vmatmul.mubr.bf16.gmra.mrb[0].mxu0 %v1762
    %v1889 = vpop.f32.mrb[0].mxu0
    %v1890 = vadd.f32 %v1789, %v1889
    %v1891 = vpop.f32.mrb[0].mxu0
    %v1892 = vpop.f32.mrb[0].mxu0
    %v1893 = vadd.f32 %v1789, %v1892
    %v1894 = vpop.f32.mrb[0].mxu0
    %1895 = vmatprep.mubr.bf16.mxu0 0
    %1896 = vmatmul.mubr.bf16.gmra.mrb[0].mxu0 %v1763
    %v1897 = vpop.f32.mrb[0].mxu0
    %v1898 = vadd.f32 %v1789, %v1897
    %v1899 = vpop.f32.mrb[0].mxu0
    %v1900 = vpop.f32.mrb[0].mxu0
    %v1901 = vadd.f32 %v1789, %v1900
    %v1902 = vpop.f32.mrb[0].mxu0
    %1903 = vmatprep.mubr.bf16.mxu0 0
    %1904 = vmatmul.mubr.bf16.gmra.mrb[0].mxu0 %v1764
    %v1905 = vpop.f32.mrb[0].mxu0
    %v1906 = vadd.f32 %v1789, %v1905
    %v1907 = vpop.f32.mrb[0].mxu0
    %v1908 = vpop.f32.mrb[0].mxu0
    %v1909 = vadd.f32 %v1789, %v1908
    %v1910 = vpop.f32.mrb[0].mxu0
    %1911 = vmatprep.mubr.bf16.mxu0 0
    %1912 = vmatmul.mubr.bf16.gmra.mrb[0].mxu0 %v1765
    %v1913 = vpop.f32.mrb[0].mxu0
    %v1914 = vadd.f32 %v1789, %v1913
    %v1915 = vpop.f32.mrb[0].mxu0
    %v1916 = vpop.f32.mrb[0].mxu0
    %v1917 = vadd.f32 %v1789, %v1916
    %v1918 = vpop.f32.mrb[0].mxu0
    %1919 = vmatprep.mubr.bf16.mxu0 0
    %1920 = vmatmul.mubr.bf16.gmra.mrb[0].mxu0 %v1766
    %v1921 = vpop.f32.mrb[0].mxu0
    %v1922 = vadd.f32 %v1789, %v1921
    %v1923 = vpop.f32.mrb[0].mxu0
    %v1924 = vpop.f32.mrb[0].mxu0
    %v1925 = vadd.f32 %v1789, %v1924
    %v1926 = vpop.f32.mrb[0].mxu0
    %1927 = vmatprep.mubr.bf16.mxu0 0
    %1928 = vmatmul.mubr.bf16.gmra.mrb[0].mxu0 %v1767
    %v1929 = vpop.f32.mrb[0].mxu0
    %v1930 = vadd.f32 %v1789, %v1929
    %v1931 = vpop.f32.mrb[0].mxu0
    %v1932 = vpop.f32.mrb[0].mxu0
    %v1933 = vadd.f32 %v1789, %v1932
    %v1934 = vpop.f32.mrb[0].mxu0
    %1935 = vdwg.mxu0
    %v1936 = vmax.f32 %v1874, 0.0
    %v1937 = vmax.f32 %v1877, 0.0
    %v1938 = vmax.f32 %v1882, 0.0
    %v1939 = vmax.f32 %v1885, 0.0
    %v1940 = vmax.f32 %v1890, 0.0
    %v1941 = vmax.f32 %v1893, 0.0
    %v1942 = vmax.f32 %v1898, 0.0
    %v1943 = vmax.f32 %v1901, 0.0
    %v1944 = vmax.f32 %v1906, 0.0
    %v1945 = vmax.f32 %v1909, 0.0
    %v1946 = vmax.f32 %v1914, 0.0
    %v1947 = vmax.f32 %v1917, 0.0
    %v1948 = vmax.f32 %v1922, 0.0
    %v1949 = vmax.f32 %v1925, 0.0
    %v1950 = vmax.f32 %v1930, 0.0
    %v1951 = vmax.f32 %v1933, 0.0
    %v1952 = vld [vmem:[%s8] sm:$0x1]
    %v1954 = vlaneseq
    %v1955 = vshrl.u32 %v1954, 7
    %v1956 = vsub.s32 0, %v1955
    %v1957 = vrot.slane %v1952, %v1956
    %v1959 = vadd.f32 %v1936, %v1957
    %v1960 = vadd.f32 %v1937, %v1957
    %v1961 = vadd.f32 %v1938, %v1957
    %v1962 = vadd.f32 %v1939, %v1957
    %v1963 = vadd.f32 %v1940, %v1957
    %v1964 = vadd.f32 %v1941, %v1957
    %v1965 = vadd.f32 %v1942, %v1957
    %v1966 = vadd.f32 %v1943, %v1957
    %v1967 = vadd.f32 %v1944, %v1957
    %v1968 = vadd.f32 %v1945, %v1957
    %v1969 = vadd.f32 %v1946, %v1957
    %v1970 = vadd.f32 %v1947, %v1957
    %v1971 = vadd.f32 %v1948, %v1957
    %v1972 = vadd.f32 %v1949, %v1957
    %v1973 = vadd.f32 %v1950, %v1957
    %v1974 = vadd.f32 %v1951, %v1957
    %1975 = vmax.xlane.f32.xlu0 %v1959
    %v1976 = vpop.xlane.xlu0 %1975
    %1977 = vmax.xlane.f32.xlu0 %v1960
    %v1978 = vpop.xlane.xlu0 %1977
    %1979 = vmax.xlane.f32.xlu0 %v1961
    %v1980 = vpop.xlane.xlu0 %1979
    %1981 = vmax.xlane.f32.xlu0 %v1962
    %v1982 = vpop.xlane.xlu0 %1981
    %1983 = vmax.xlane.f32.xlu0 %v1963
    %v1984 = vpop.xlane.xlu0 %1983
    %1985 = vmax.xlane.f32.xlu0 %v1964
    %v1986 = vpop.xlane.xlu0 %1985
    %1987 = vmax.xlane.f32.xlu0 %v1965
    %v1988 = vpop.xlane.xlu0 %1987
    %1989 = vmax.xlane.f32.xlu0 %v1966
    %v1990 = vpop.xlane.xlu0 %1989
    %1991 = vmax.xlane.f32.xlu0 %v1967
    %v1992 = vpop.xlane.xlu0 %1991
    %1993 = vmax.xlane.f32.xlu0 %v1968
    %v1994 = vpop.xlane.xlu0 %1993
    %1995 = vmax.xlane.f32.xlu0 %v1969
    %v1996 = vpop.xlane.xlu0 %1995
    %1997 = vmax.xlane.f32.xlu0 %v1970
    %v1998 = vpop.xlane.xlu0 %1997
    %1999 = vmax.xlane.f32.xlu0 %v1971
    %v2000 = vpop.xlane.xlu0 %1999
    %2001 = vmax.xlane.f32.xlu0 %v1972
    %v2002 = vpop.xlane.xlu0 %2001
    %2003 = vmax.xlane.f32.xlu0 %v1973
    %v2004 = vpop.xlane.xlu0 %2003
    %2005 = vmax.xlane.f32.xlu0 %v1974
    %v2006 = vpop.xlane.xlu0 %2005
    %v2007 = vsub.f32 %v1959, %v1976
    %v2008 = vsub.f32 %v1960, %v1978
    %v2009 = vsub.f32 %v1961, %v1980
    %v2010 = vsub.f32 %v1962, %v1982
    %v2011 = vsub.f32 %v1963, %v1984
    %v2012 = vsub.f32 %v1964, %v1986
    %v2013 = vsub.f32 %v1965, %v1988
    %v2014 = vsub.f32 %v1966, %v1990
    %v2015 = vsub.f32 %v1967, %v1992
    %v2016 = vsub.f32 %v1968, %v1994
    %v2017 = vsub.f32 %v1969, %v1996
    %v2018 = vsub.f32 %v1970, %v1998
    %v2019 = vsub.f32 %v1971, %v2000
    %v2020 = vsub.f32 %v1972, %v2002
    %v2021 = vsub.f32 %v1973, %v2004
    %v2022 = vsub.f32 %v1974, %v2006
    %v2023 = vmul.f32 %v2007, 1.442695
    %v2024 = vpow.pop %v2023
    %v2025 = vmul.f32 %v2008, 1.442695
    %v2026 = vpow.pop %v2025
    %v2027 = vmul.f32 %v2009, 1.442695
    %v2028 = vpow.pop %v2027
    %v2029 = vmul.f32 %v2010, 1.442695
    %v2030 = vpow.pop %v2029
    %v2031 = vmul.f32 %v2011, 1.442695
    %v2032 = vpow.pop %v2031
    %v2033 = vmul.f32 %v2012, 1.442695
    %v2034 = vpow.pop %v2033
    %v2035 = vmul.f32 %v2013, 1.442695
    %v2036 = vpow.pop %v2035
    %v2037 = vmul.f32 %v2014, 1.442695
    %v2038 = vpow.pop %v2037
    %v2039 = vmul.f32 %v2015, 1.442695
    %v2040 = vpow.pop %v2039
    %v2041 = vmul.f32 %v2016, 1.442695
    %v2042 = vpow.pop %v2041
    %v2043 = vmul.f32 %v2017, 1.442695
    %v2044 = vpow.pop %v2043
    %v2045 = vmul.f32 %v2018, 1.442695
    %v2046 = vpow.pop %v2045
    %v2047 = vmul.f32 %v2019, 1.442695
    %v2048 = vpow.pop %v2047
    %v2049 = vmul.f32 %v2020, 1.442695
    %v2050 = vpow.pop %v2049
    %v2051 = vmul.f32 %v2021, 1.442695
    %v2052 = vpow.pop %v2051
    %v2053 = vmul.f32 %v2022, 1.442695
    %v2054 = vpow.pop %v2053
    %2055 = vadd.xlane.f32.xlu0 %v2024
    %v2056 = vpop.xlane.xlu0 %2055
    %2057 = vadd.xlane.f32.xlu0 %v2026
    %v2058 = vpop.xlane.xlu0 %2057
    %2059 = vadd.xlane.f32.xlu0 %v2028
    %v2060 = vpop.xlane.xlu0 %2059
    %2061 = vadd.xlane.f32.xlu0 %v2030
    %v2062 = vpop.xlane.xlu0 %2061
    %2063 = vadd.xlane.f32.xlu0 %v2032
    %v2064 = vpop.xlane.xlu0 %2063
    %2065 = vadd.xlane.f32.xlu0 %v2034
    %v2066 = vpop.xlane.xlu0 %2065
    %2067 = vadd.xlane.f32.xlu0 %v2036
    %v2068 = vpop.xlane.xlu0 %2067
    %2069 = vadd.xlane.f32.xlu0 %v2038
    %v2070 = vpop.xlane.xlu0 %2069
    %2071 = vadd.xlane.f32.xlu0 %v2040
    %v2072 = vpop.xlane.xlu0 %2071
    %2073 = vadd.xlane.f32.xlu0 %v2042
    %v2074 = vpop.xlane.xlu0 %2073
    %2075 = vadd.xlane.f32.xlu0 %v2044
    %v2076 = vpop.xlane.xlu0 %2075
    %2077 = vadd.xlane.f32.xlu0 %v2046
    %v2078 = vpop.xlane.xlu0 %2077
    %2079 = vadd.xlane.f32.xlu0 %v2048
    %v2080 = vpop.xlane.xlu0 %2079
    %2081 = vadd.xlane.f32.xlu0 %v2050
    %v2082 = vpop.xlane.xlu0 %2081
    %2083 = vadd.xlane.f32.xlu0 %v2052
    %v2084 = vpop.xlane.xlu0 %2083
    %2085 = vadd.xlane.f32.xlu0 %v2054
    %v2086 = vpop.xlane.xlu0 %2085
    %v2087 = vlog2.pop %v2056
    %v2088 = vmul.f32 %v2087, 0.6931472
    %v2089 = vlog2.pop %v2058
    %v2090 = vmul.f32 %v2089, 0.6931472
    %v2091 = vlog2.pop %v2060
    %v2092 = vmul.f32 %v2091, 0.6931472
    %v2093 = vlog2.pop %v2062
    %v2094 = vmul.f32 %v2093, 0.6931472
    %v2095 = vlog2.pop %v2064
    %v2096 = vmul.f32 %v2095, 0.6931472
    %v2097 = vlog2.pop %v2066
    %v2098 = vmul.f32 %v2097, 0.6931472
    %v2099 = vlog2.pop %v2068
    %v2100 = vmul.f32 %v2099, 0.6931472
    %v2101 = vlog2.pop %v2070
    %v2102 = vmul.f32 %v2101, 0.6931472
    %v2103 = vlog2.pop %v2072
    %v2104 = vmul.f32 %v2103, 0.6931472
    %v2105 = vlog2.pop %v2074
    %v2106 = vmul.f32 %v2105, 0.6931472
    %v2107 = vlog2.pop %v2076
    %v2108 = vmul.f32 %v2107, 0.6931472
    %v2109 = vlog2.pop %v2078
    %v2110 = vmul.f32 %v2109, 0.6931472
    %v2111 = vlog2.pop %v2080
    %v2112 = vmul.f32 %v2111, 0.6931472
    %v2113 = vlog2.pop %v2082
    %v2114 = vmul.f32 %v2113, 0.6931472
    %v2115 = vlog2.pop %v2084
    %v2116 = vmul.f32 %v2115, 0.6931472
    %v2117 = vlog2.pop %v2086
    %v2118 = vmul.f32 %v2117, 0.6931472
    %v2119 = vsub.f32 %v2007, %v2088
    %v2120 = vsub.f32 %v2008, %v2090
    %v2121 = vsub.f32 %v2009, %v2092
    %v2122 = vsub.f32 %v2010, %v2094
    %v2123 = vsub.f32 %v2011, %v2096
    %v2124 = vsub.f32 %v2012, %v2098
    %v2125 = vsub.f32 %v2013, %v2100
    %v2126 = vsub.f32 %v2014, %v2102
    %v2127 = vsub.f32 %v2015, %v2104
    %v2128 = vsub.f32 %v2016, %v2106
    %v2129 = vsub.f32 %v2017, %v2108
    %v2130 = vsub.f32 %v2018, %v2110
    %v2131 = vsub.f32 %v2019, %v2112
    %v2132 = vsub.f32 %v2020, %v2114
    %v2133 = vsub.f32 %v2021, %v2116
    %v2134 = vsub.f32 %v2022, %v2118
    %2135 = vst [vmem:[%s9] sm:$0xff] %v2119
    %2136 = vst [vmem:[%s9 + $0x8] sm:$0xff] %v2120
    %2137 = vst [vmem:[%s9 + $0x10] sm:$0xff] %v2121
    %2138 = vst [vmem:[%s9 + $0x18] sm:$0xff] %v2122
    %2139 = vst [vmem:[%s9 + $0x20] sm:$0xff] %v2123
    %2140 = vst [vmem:[%s9 + $0x28] sm:$0xff] %v2124
    %2141 = vst [vmem:[%s9 + $0x30] sm:$0xff] %v2125
    %2142 = vst [vmem:[%s9 + $0x38] sm:$0xff] %v2126
    %2143 = vst [vmem:[%s9 + $0x40] sm:$0xff] %v2127
    %2144 = vst [vmem:[%s9 + $0x48] sm:$0xff] %v2128
    %2145 = vst [vmem:[%s9 + $0x50] sm:$0xff] %v2129
    %2146 = vst [vmem:[%s9 + $0x58] sm:$0xff] %v2130
    %2147 = vst [vmem:[%s9 + $0x60] sm:$0xff] %v2131
    %2148 = vst [vmem:[%s9 + $0x68] sm:$0xff] %v2132
    %2149 = vst [vmem:[%s9 + $0x70] sm:$0xff] %v2133
    %2150 = vst [vmem:[%s9 + $0x78] sm:$0xff] %v2134
    // Predicated region
    $region46: #{gcn_forward.1} parent=1 // pred_check
      _
    $region47: #{gcn_forward.1} parent=1 // pred_check_branch
      %2152 = sbr.rel (0) target = $region49
    $region48: #{gcn_forward.1} parent=1 // pred_region
      _
    $region49: #{gcn_forward.1} parent=1 // pred_fallthru
      _
    // Predicated region
    $region50: #{gcn_forward.1} parent=1 // pred_check
      _
    $region51: #{gcn_forward.1} parent=1 // pred_check_branch
      %2154 = sbr.rel (0) target = $region53
    $region52: #{gcn_forward.1} parent=1 // pred_region
      _
    $region53: #{gcn_forward.1} parent=1 // pred_fallthru
      _
    %2155 = vsyncpa [#allocation3], 1
    %2156 = vsyncpa [#allocation5], 1

</llo_original>
